<compile_context>
chip_gen: v5e
topology: v5e:2x2
jax: 0.10.0
libtpu: 0.0.40
codegen_flags: <defaults>
</compile_context>

<pallas_src>
import functools

import jax
import jax.numpy as jnp
from jax.experimental import pallas as pl
from jax.experimental.pallas import tpu as pltpu


def _round_up(n, m):
    return ((n + m - 1) // m) * m


def make_mlp_kernel(num_linear, compute_dtype):
    """Fused kernel for `num_linear` Linear layers (ReLU between all but last)."""

    def kernel(*refs):
        # refs = (xT, w0, b0, w1, b1, ..., w_last, b_last, outT)
        xT_ref = refs[0]
        o_ref = refs[-1]
        param_refs = refs[1:-1]

        h = xT_ref[...]                                # (3, tile_b), compute dtype
        for l in range(num_linear):
            w = param_refs[2 * l][...]                 # (out, in)  compute dtype
            b = param_refs[2 * l + 1][...]             # (out, 1)   f32
            # bf16 x bf16 on the MXU, f32 accumulation; bias added in f32.
            h = jnp.dot(w, h, preferred_element_type=jnp.float32) + b
            if l < num_linear - 1:
                # ReLU, then back to the MXU-native dtype for the next matmul.
                h = jnp.maximum(h, 0.0).astype(compute_dtype)

        o_ref[...] = h.astype(o_ref.dtype)             # (1, tile_b) lane-dense store

    return kernel


def _auto_tile_b(batch, d_max, requested, in_bytes, out_bytes):
    """Lane-dense batch tile that fits the VMEM budget and keeps >= 2 grid steps."""
    # Per lane-column VMEM bytes:
    #   double-buffered input tile  (8-sublane padded) : 2 * 8 * in_bytes
    #   double-buffered output tile (8-sublane padded) : 2 * 8 * out_bytes
    #   ~2 live f32 intermediates of (d_max, tile_b)   : 2 * d_max * 4
    per_col = 2 * 8 * in_bytes + 2 * 8 * out_bytes + 2 * max(d_max, 8) * 4
    budget = 20 * 1024 * 1024  # generous headroom on v7x's 64 MiB / 32 MiB scoped
    cap = max(128, (budget // per_col) // 128 * 128)
    tile = max(128, (min(int(requested), cap) // 128) * 128)

    b128 = _round_up(batch, 128)
    if b128 >= 256:
        # Keep at least 2 grid steps so v7x's two TensorCores both get work.
        tile = min(tile, max(128, _round_up(b128 // 2, 128)))
    else:
        tile = b128
    return tile


@functools.partial(
    jax.jit,
    static_argnames=("tile_b", "compute_dtype", "out_dtype", "single_buffer_params"),
)
def mlp_forward(x, params, *, tile_b=8192, compute_dtype=jnp.bfloat16,
                out_dtype=jnp.float32, single_buffer_params=True):
    """Run the fused MLP Pallas kernel.

    x:      (B, 3)
    params: [w0, b0, w1, b1, ...] with weights in PyTorch layout (out, in)
            and biases stored as (out, 1) columns.
    """
    B, d_in = x.shape
    num_linear = len(params) // 2
    d_out = params[-2].shape[0]
    d_max = max(p.shape[0] for p in params[::2])

    in_bytes = jnp.dtype(compute_dtype).itemsize
    out_bytes = jnp.dtype(out_dtype).itemsize
    tile_b = _auto_tile_b(B, d_max, tile_b, in_bytes, out_bytes)
    grid_b = pl.cdiv(B, tile_b)
    B_pad = grid_b * tile_b

    # Cast + pad + transpose all under the same jit -> one fused HBM pass.
    xT = jnp.pad(x.astype(compute_dtype), ((0, B_pad - B), (0, 0))).T  # (3, B_pad)

    # Weights in MXU dtype; biases kept f32 for the post-accumulate add.
    kernel_params = []
    for l in range(num_linear):
        kernel_params.append(params[2 * l].astype(compute_dtype))
        kernel_params.append(params[2 * l + 1].astype(jnp.float32))

    # Parameters never change block index: constant index map, single buffer.
    def param_spec(shape):
        if single_buffer_params:
            return pl.BlockSpec(shape, lambda i: (0, 0),
                                pipeline_mode=pl.Buffered(1))
        return pl.BlockSpec(shape, lambda i: (0, 0))

    in_specs = [pl.BlockSpec((d_in, tile_b), lambda i: (0, i))]
    in_specs += [param_spec(p.shape) for p in kernel_params]
    out_spec = pl.BlockSpec((d_out, tile_b), lambda i: (0, i))

    outT = pl.pallas_call(
        make_mlp_kernel(num_linear, compute_dtype),
        out_shape=jax.ShapeDtypeStruct((d_out, B_pad), out_dtype),
        grid_spec=pltpu.PrefetchScalarGridSpec(
            num_scalar_prefetch=0,
            grid=(grid_b,),
            in_specs=in_specs,
            out_specs=out_spec,
        ),
        compiler_params=pltpu.CompilerParams(
            dimension_semantics=("parallel",),       # batch tiles -> both v7x TCs
            vmem_limit_bytes=32 * 1024 * 1024,       # above v5e's 16 MiB default
        ),
    )(xT, *kernel_params)

    # (1, B_pad) -> (B, 1): slice + degenerate reshape (d_out == 1), no transpose.
    out = outT[:, :B]
    return out.reshape(B, d_out) if d_out == 1 else out.T


def init_mlp_params(key, num_layers, layers_dim):
    """Deterministic init matching the PyTorch module.

    nn.Linear(in, out): weight (out, in), bias (out,), both U(-1/sqrt(in), 1/sqrt(in)).
    Weights kept in (out, in) layout; biases stored as (out, 1) columns.
    """
    if not isinstance(layers_dim, list):
        layers_dim = [layers_dim] * num_layers

    dims = [(3, layers_dim[0])]
    for i in range(len(layers_dim) - 1):
        dims.append((layers_dim[i], layers_dim[i + 1]))
    dims.append((layers_dim[-1], 1))

    params = []
    for fan_in, fan_out in dims:
        key, kw, kb = jax.random.split(key, 3)
        bound = 1.0 / jnp.sqrt(jnp.float32(fan_in))
        w = jax.random.uniform(kw, (fan_out, fan_in), jnp.float32, -bound, bound)
        b = jax.random.uniform(kb, (fan_out, 1), jnp.float32, -bound, bound)
        params += [w, b]
    return params


def mlp_reference(x, params, compute_dtype=jnp.float32):
    """Pure-JAX reference (batch-major); compute_dtype mirrors the kernel's casts."""
    num_linear = len(params) // 2
    h = x.astype(compute_dtype)
    for l in range(num_linear):
        w = params[2 * l].astype(compute_dtype)
        b = params[2 * l + 1].astype(jnp.float32)
        h = jnp.dot(h, w.T, preferred_element_type=jnp.float32) + b.reshape(1, -1)
        if l < num_linear - 1:
            h = jnp.maximum(h, 0.0).astype(compute_dtype)
    return h


if __name__ == "__main__":
    key = jax.random.PRNGKey(0)
    key, kx = jax.random.split(key)

    # MLP(num_layers=2, layers_dim=32):
    #   Linear(3,32) -> ReLU -> Linear(32,32) -> ReLU -> Linear(32,1)
    num_layers = 2
    layers_dim = 32
    batch = 1000  # non-multiple of 128 -> exercises padding; auto-tiled to a 2-step grid

    x = jax.random.normal(kx, (batch, 3), jnp.float32)
    params = init_mlp_params(key, num_layers, layers_dim)

    try:
        out = mlp_forward(x, params)  # bf16 compute, single-buffered param specs
    except Exception:
        # Fallback if this JAX build rejects pl.Buffered(1) on the param specs.
        out = mlp_forward(x, params, single_buffer_params=False)
    out = jax.block_until_ready(out)

    assert out.shape == (batch, 1), out.shape

    # Primary check: reference using the same bf16-input / f32-accumulate numerics.
    ref_bf16 = mlp_reference(x, params, compute_dtype=jnp.bfloat16)
    assert jnp.allclose(out, ref_bf16, atol=5e-3, rtol=5e-3), "mismatch vs bf16 reference"

    # Loose sanity check against the full-f32 forward (bf16 rounding only).
    ref_f32 = mlp_reference(x, params, compute_dtype=jnp.float32)
    assert jnp.allclose(out, ref_f32, atol=5e-2, rtol=5e-2), "mismatch vs f32 reference"

    print("KERNEL_OK")
</pallas_src>

<mosaic_0001>
module attributes {stable_mosaic.version = 11 : i64} {
  func.func @kernel(%arg0: i32, %arg1: memref<3x512xbf16, #tpu.memory_space<vmem>>, %arg2: memref<32x3xbf16, #tpu.memory_space<vmem>>, %arg3: memref<32x1xf32, #tpu.memory_space<vmem>>, %arg4: memref<32x32xbf16, #tpu.memory_space<vmem>>, %arg5: memref<32x1xf32, #tpu.memory_space<vmem>>, %arg6: memref<1x32xbf16, #tpu.memory_space<vmem>>, %arg7: memref<1x1xf32, #tpu.memory_space<vmem>>, %arg8: memref<1x512xf32, #tpu.memory_space<vmem>>) attributes {dimension_semantics = [#tpu.dimension_semantics<parallel>], iteration_bounds = array<i64: 2>, scalar_prefetch = 0 : i64, scratch_operands = 0 : i64, tpu.core_type = #tpu.core_type<tc>, window_params = [{transform_indices = @transform_0, window_bounds = array<i64: 3, 512>}, {pipeline_mode = #tpu.pipeline_mode<synchronous>, transform_indices = @transform_1, window_bounds = array<i64: 32, 3>}, {pipeline_mode = #tpu.pipeline_mode<synchronous>, transform_indices = @transform_2, window_bounds = array<i64: 32, 1>}, {pipeline_mode = #tpu.pipeline_mode<synchronous>, transform_indices = @transform_3, window_bounds = array<i64: 32, 32>}, {pipeline_mode = #tpu.pipeline_mode<synchronous>, transform_indices = @transform_4, window_bounds = array<i64: 32, 1>}, {pipeline_mode = #tpu.pipeline_mode<synchronous>, transform_indices = @transform_5, window_bounds = array<i64: 1, 32>}, {pipeline_mode = #tpu.pipeline_mode<synchronous>, transform_indices = @transform_6, window_bounds = array<i64: 1, 1>}, {transform_indices = @transform_7, window_bounds = array<i64: 1, 512>}]} {
    %c0 = arith.constant 0 : index
    %c0_0 = arith.constant 0 : index
    %0 = vector.load %arg1[%c0, %c0_0] : memref<3x512xbf16, #tpu.memory_space<vmem>>, vector<3x512xbf16>
    %c0_1 = arith.constant 0 : index
    %c0_2 = arith.constant 0 : index
    %1 = vector.load %arg2[%c0_1, %c0_2] : memref<32x3xbf16, #tpu.memory_space<vmem>>, vector<32x3xbf16>
    %c0_3 = arith.constant 0 : index
    %c0_4 = arith.constant 0 : index
    %2 = vector.load %arg3[%c0_3, %c0_4] : memref<32x1xf32, #tpu.memory_space<vmem>>, vector<32x1xf32>
    %cst = arith.constant dense<0.000000e+00> : vector<32x512xf32>
    %3 = tpu.matmul %1, %0, %cst {dimension_numbers = #tpu.dot_dimension_numbers<[1], [0], [0], [1], [0, 0, 1, 1], [], []>} : vector<32x3xbf16>, vector<3x512xbf16>, vector<32x512xf32> -> vector<32x512xf32>
    %4 = vector.broadcast %2 : vector<32x1xf32> to vector<32x512xf32>
    %5 = arith.addf %3, %4 : vector<32x512xf32>
    %cst_5 = arith.constant 0.000000e+00 : f32
    %6 = vector.broadcast %cst_5 : f32 to vector<32x512xf32>
    %7 = arith.maximumf %5, %6 : vector<32x512xf32>
    %8 = arith.truncf %7 : vector<32x512xf32> to vector<32x512xbf16>
    %c0_6 = arith.constant 0 : index
    %c0_7 = arith.constant 0 : index
    %9 = vector.load %arg4[%c0_6, %c0_7] : memref<32x32xbf16, #tpu.memory_space<vmem>>, vector<32x32xbf16>
    %c0_8 = arith.constant 0 : index
    %c0_9 = arith.constant 0 : index
    %10 = vector.load %arg5[%c0_8, %c0_9] : memref<32x1xf32, #tpu.memory_space<vmem>>, vector<32x1xf32>
    %cst_10 = arith.constant dense<0.000000e+00> : vector<32x512xf32>
    %11 = tpu.matmul %9, %8, %cst_10 {dimension_numbers = #tpu.dot_dimension_numbers<[1], [0], [0], [1], [0, 0, 1, 1], [], []>} : vector<32x32xbf16>, vector<32x512xbf16>, vector<32x512xf32> -> vector<32x512xf32>
    %12 = vector.broadcast %10 : vector<32x1xf32> to vector<32x512xf32>
    %13 = arith.addf %11, %12 : vector<32x512xf32>
    %cst_11 = arith.constant 0.000000e+00 : f32
    %14 = vector.broadcast %cst_11 : f32 to vector<32x512xf32>
    %15 = arith.maximumf %13, %14 : vector<32x512xf32>
    %16 = arith.truncf %15 : vector<32x512xf32> to vector<32x512xbf16>
    %c0_12 = arith.constant 0 : index
    %c0_13 = arith.constant 0 : index
    %17 = vector.load %arg6[%c0_12, %c0_13] : memref<1x32xbf16, #tpu.memory_space<vmem>>, vector<1x32xbf16>
    %c0_14 = arith.constant 0 : index
    %c0_15 = arith.constant 0 : index
    %18 = vector.load %arg7[%c0_14, %c0_15] : memref<1x1xf32, #tpu.memory_space<vmem>>, vector<1x1xf32>
    %cst_16 = arith.constant dense<0.000000e+00> : vector<1x512xf32>
    %19 = tpu.matmul %17, %16, %cst_16 {dimension_numbers = #tpu.dot_dimension_numbers<[1], [0], [0], [1], [0, 0, 1, 1], [], []>} : vector<1x32xbf16>, vector<32x512xbf16>, vector<1x512xf32> -> vector<1x512xf32>
    %20 = vector.broadcast %18 : vector<1x1xf32> to vector<1x512xf32>
    %21 = arith.addf %19, %20 : vector<1x512xf32>
    %c0_17 = arith.constant 0 : index
    %c0_18 = arith.constant 0 : index
    %22 = vector.load %arg8[%c0_17, %c0_18] : memref<1x512xf32, #tpu.memory_space<vmem>>, vector<1x512xf32>
    tpu.vector_store %arg8[%c0_17, %c0_18], %21 {strides = array<i32>} : memref<1x512xf32, #tpu.memory_space<vmem>>, vector<1x512xf32>,
    return
  }
  func.func @transform_0(%arg0: i32) -> (i32, i32) {
    %c0_i32 = arith.constant 0 : i32
    %c0_i32_0 = arith.constant 0 : i32
    return %c0_i32, %arg0 : i32, i32
  }
  func.func @transform_1(%arg0: i32) -> (i32, i32) {
    %c0_i32 = arith.constant 0 : i32
    %c0_i32_0 = arith.constant 0 : i32
    %c0_i32_1 = arith.constant 0 : i32
    return %c0_i32, %c0_i32_0 : i32, i32
  }
  func.func @transform_2(%arg0: i32) -> (i32, i32) {
    %c0_i32 = arith.constant 0 : i32
    %c0_i32_0 = arith.constant 0 : i32
    %c0_i32_1 = arith.constant 0 : i32
    return %c0_i32, %c0_i32_0 : i32, i32
  }
  func.func @transform_3(%arg0: i32) -> (i32, i32) {
    %c0_i32 = arith.constant 0 : i32
    %c0_i32_0 = arith.constant 0 : i32
    %c0_i32_1 = arith.constant 0 : i32
    return %c0_i32, %c0_i32_0 : i32, i32
  }
  func.func @transform_4(%arg0: i32) -> (i32, i32) {
    %c0_i32 = arith.constant 0 : i32
    %c0_i32_0 = arith.constant 0 : i32
    %c0_i32_1 = arith.constant 0 : i32
    return %c0_i32, %c0_i32_0 : i32, i32
  }
  func.func @transform_5(%arg0: i32) -> (i32, i32) {
    %c0_i32 = arith.constant 0 : i32
    %c0_i32_0 = arith.constant 0 : i32
    %c0_i32_1 = arith.constant 0 : i32
    return %c0_i32, %c0_i32_0 : i32, i32
  }
  func.func @transform_6(%arg0: i32) -> (i32, i32) {
    %c0_i32 = arith.constant 0 : i32
    %c0_i32_0 = arith.constant 0 : i32
    %c0_i32_1 = arith.constant 0 : i32
    return %c0_i32, %c0_i32_0 : i32, i32
  }
  func.func @transform_7(%arg0: i32) -> (i32, i32) {
    %c0_i32 = arith.constant 0 : i32
    %c0_i32_0 = arith.constant 0 : i32
    return %c0_i32, %arg0 : i32, i32
  }
}

module attributes {stable_mosaic.version = 11 : i64} {
  func.func @kernel(%arg0: i32, %arg1: memref<3x512xbf16, #tpu.memory_space<vmem>>, %arg2: memref<32x3xbf16, #tpu.memory_space<vmem>>, %arg3: memref<32x1xf32, #tpu.memory_space<vmem>>, %arg4: memref<32x32xbf16, #tpu.memory_space<vmem>>, %arg5: memref<32x1xf32, #tpu.memory_space<vmem>>, %arg6: memref<1x32xbf16, #tpu.memory_space<vmem>>, %arg7: memref<1x1xf32, #tpu.memory_space<vmem>>, %arg8: memref<1x512xf32, #tpu.memory_space<vmem>>) attributes {dimension_semantics = [#tpu.dimension_semantics<parallel>], iteration_bounds = array<i64: 2>, scalar_prefetch = 0 : i64, scratch_operands = 0 : i64, tpu.core_type = #tpu.core_type<tc>, window_params = [{transform_indices = @transform_0, window_bounds = array<i64: 3, 512>}, {pipeline_mode = #tpu.pipeline_mode<synchronous>, transform_indices = @transform_1, window_bounds = array<i64: 32, 3>}, {pipeline_mode = #tpu.pipeline_mode<synchronous>, transform_indices = @transform_2, window_bounds = array<i64: 32, 1>}, {pipeline_mode = #tpu.pipeline_mode<synchronous>, transform_indices = @transform_3, window_bounds = array<i64: 32, 32>}, {pipeline_mode = #tpu.pipeline_mode<synchronous>, transform_indices = @transform_4, window_bounds = array<i64: 32, 1>}, {pipeline_mode = #tpu.pipeline_mode<synchronous>, transform_indices = @transform_5, window_bounds = array<i64: 1, 32>}, {pipeline_mode = #tpu.pipeline_mode<synchronous>, transform_indices = @transform_6, window_bounds = array<i64: 1, 1>}, {transform_indices = @transform_7, window_bounds = array<i64: 1, 512>}]} {
    %c0 = arith.constant 0 : index
    %c0_0 = arith.constant 0 : index
    %0 = vector.load %arg1[%c0, %c0_0] : memref<3x512xbf16, #tpu.memory_space<vmem>>, vector<3x512xbf16>
    %c0_1 = arith.constant 0 : index
    %c0_2 = arith.constant 0 : index
    %1 = vector.load %arg2[%c0_1, %c0_2] : memref<32x3xbf16, #tpu.memory_space<vmem>>, vector<32x3xbf16>
    %c0_3 = arith.constant 0 : index
    %c0_4 = arith.constant 0 : index
    %2 = vector.load %arg3[%c0_3, %c0_4] : memref<32x1xf32, #tpu.memory_space<vmem>>, vector<32x1xf32>
    %cst = arith.constant dense<0.000000e+00> : vector<32x512xf32>
    %3 = tpu.matmul %1, %0, %cst {dimension_numbers = #tpu.dot_dimension_numbers<[1], [0], [0], [1], [0, 0, 1, 1], [], []>} : vector<32x3xbf16>, vector<3x512xbf16>, vector<32x512xf32> -> vector<32x512xf32>
    %4 = vector.broadcast %2 : vector<32x1xf32> to vector<32x512xf32>
    %5 = arith.addf %3, %4 : vector<32x512xf32>
    %cst_5 = arith.constant 0.000000e+00 : f32
    %6 = vector.broadcast %cst_5 : f32 to vector<32x512xf32>
    %7 = arith.maximumf %5, %6 : vector<32x512xf32>
    %8 = arith.truncf %7 : vector<32x512xf32> to vector<32x512xbf16>
    %c0_6 = arith.constant 0 : index
    %c0_7 = arith.constant 0 : index
    %9 = vector.load %arg4[%c0_6, %c0_7] : memref<32x32xbf16, #tpu.memory_space<vmem>>, vector<32x32xbf16>
    %c0_8 = arith.constant 0 : index
    %c0_9 = arith.constant 0 : index
    %10 = vector.load %arg5[%c0_8, %c0_9] : memref<32x1xf32, #tpu.memory_space<vmem>>, vector<32x1xf32>
    %cst_10 = arith.constant dense<0.000000e+00> : vector<32x512xf32>
    %11 = tpu.matmul %9, %8, %cst_10 {dimension_numbers = #tpu.dot_dimension_numbers<[1], [0], [0], [1], [0, 0, 1, 1], [], []>} : vector<32x32xbf16>, vector<32x512xbf16>, vector<32x512xf32> -> vector<32x512xf32>
    %12 = vector.broadcast %10 : vector<32x1xf32> to vector<32x512xf32>
    %13 = arith.addf %11, %12 : vector<32x512xf32>
    %cst_11 = arith.constant 0.000000e+00 : f32
    %14 = vector.broadcast %cst_11 : f32 to vector<32x512xf32>
    %15 = arith.maximumf %13, %14 : vector<32x512xf32>
    %16 = arith.truncf %15 : vector<32x512xf32> to vector<32x512xbf16>
    %c0_12 = arith.constant 0 : index
    %c0_13 = arith.constant 0 : index
    %17 = vector.load %arg6[%c0_12, %c0_13] : memref<1x32xbf16, #tpu.memory_space<vmem>>, vector<1x32xbf16>
    %c0_14 = arith.constant 0 : index
    %c0_15 = arith.constant 0 : index
    %18 = vector.load %arg7[%c0_14, %c0_15] : memref<1x1xf32, #tpu.memory_space<vmem>>, vector<1x1xf32>
    %cst_16 = arith.constant dense<0.000000e+00> : vector<1x512xf32>
    %19 = tpu.matmul %17, %16, %cst_16 {dimension_numbers = #tpu.dot_dimension_numbers<[1], [0], [0], [1], [0, 0, 1, 1], [], []>} : vector<1x32xbf16>, vector<32x512xbf16>, vector<1x512xf32> -> vector<1x512xf32>
    %20 = vector.broadcast %18 : vector<1x1xf32> to vector<1x512xf32>
    %21 = arith.addf %19, %20 : vector<1x512xf32>
    %c0_17 = arith.constant 0 : index
    %c0_18 = arith.constant 0 : index
    %22 = vector.load %arg8[%c0_17, %c0_18] : memref<1x512xf32, #tpu.memory_space<vmem>>, vector<1x512xf32>
    tpu.vector_store %arg8[%c0_17, %c0_18], %21 {strides = array<i32>} : memref<1x512xf32, #tpu.memory_space<vmem>>, vector<1x512xf32>,
    return
  }
  func.func @transform_0(%arg0: i32) -> (i32, i32) {
    %c0_i32 = arith.constant 0 : i32
    %c0_i32_0 = arith.constant 0 : i32
    return %c0_i32, %arg0 : i32, i32
  }
  func.func @transform_1(%arg0: i32) -> (i32, i32) {
    %c0_i32 = arith.constant 0 : i32
    %c0_i32_0 = arith.constant 0 : i32
    %c0_i32_1 = arith.constant 0 : i32
    return %c0_i32, %c0_i32_0 : i32, i32
  }
  func.func @transform_2(%arg0: i32) -> (i32, i32) {
    %c0_i32 = arith.constant 0 : i32
    %c0_i32_0 = arith.constant 0 : i32
    %c0_i32_1 = arith.constant 0 : i32
    return %c0_i32, %c0_i32_0 : i32, i32
  }
  func.func @transform_3(%arg0: i32) -> (i32, i32) {
    %c0_i32 = arith.constant 0 : i32
    %c0_i32_0 = arith.constant 0 : i32
    %c0_i32_1 = arith.constant 0 : i32
    return %c0_i32, %c0_i32_0 : i32, i32
  }
  func.func @transform_4(%arg0: i32) -> (i32, i32) {
    %c0_i32 = arith.constant 0 : i32
    %c0_i32_0 = arith.constant 0 : i32
    %c0_i32_1 = arith.constant 0 : i32
    return %c0_i32, %c0_i32_0 : i32, i32
  }
  func.func @transform_5(%arg0: i32) -> (i32, i32) {
    %c0_i32 = arith.constant 0 : i32
    %c0_i32_0 = arith.constant 0 : i32
    %c0_i32_1 = arith.constant 0 : i32
    return %c0_i32, %c0_i32_0 : i32, i32
  }
  func.func @transform_6(%arg0: i32) -> (i32, i32) {
    %c0_i32 = arith.constant 0 : i32
    %c0_i32_0 = arith.constant 0 : i32
    %c0_i32_1 = arith.constant 0 : i32
    return %c0_i32, %c0_i32_0 : i32, i32
  }
  func.func @transform_7(%arg0: i32) -> (i32, i32) {
    %c0_i32 = arith.constant 0 : i32
    %c0_i32_0 = arith.constant 0 : i32
    return %c0_i32, %arg0 : i32, i32
  }
}

</mosaic_0001>

<llo_original>
// kernel: mlp_forward.1
$region0: #{mlp_forward.1}
  #allocation0 [shape = 'u32[]', space=smem, size = 0x4, offset = 0x4, fixed_abs, tag = 'smem constant byte address 0x4 - core index']
  #allocation1 [shape = 'u32[72,128]{1,0:T(1,128)}', space=vmem, size = 0x9000, scoped, tag = 'internal scratch']
  #allocation2 [shape = 'f32[1,1]{1,0:T(1,128)S(1)}', space=vmem, size = 0x200, scoped, tag = 'scoped memory for mlp_forward.1']
  %s0 = inlined_call_operand.vmem [shape: bf16[3,1024], index: 0, kind: input, shape index: {}]
  %s1 = inlined_call_operand.vmem [shape: bf16[32,3], index: 1, kind: input, shape index: {}]
  %s2 = inlined_call_operand.vmem [shape: f32[32,1], index: 2, kind: input, shape index: {}]
  %s3 = inlined_call_operand.vmem [shape: bf16[32,32], index: 3, kind: input, shape index: {}]
  %s4 = inlined_call_operand.vmem [shape: f32[32,1], index: 4, kind: input, shape index: {}]
  %s5 = inlined_call_operand.vmem [shape: bf16[1,32], index: 5, kind: input, shape index: {}]
  %s6 = inlined_call_operand.<no memory space> [shape: f32[1,1], index: 6, kind: input, shape index: {}]
  %s7 = inlined_call_operand.vmem [shape: f32[1,1024], index: 7, kind: output, shape index: {}]
  %s8 = sld [smem:[#allocation0]]
  $region61: #{mlp_forward.1} parent=0
    _
  %s10 = ssub.s32 1, %s8
  %s11 = scalar_select 0, %s10, %s8
  %v12 = vstv %s6
  %13 = vst [vmem:[#allocation2] sm:$0x1] %v12
  loop: start=0, step=1, limit=4
  $region2: #{mlp_forward.1} parent=0 // loop_pre_header
    _
  $region3: #{mlp_forward.1} parent=0 // loop_header
    %s15 = sphi 0, %s19
    %p16 = scmp.ge.s32.totalorder %s15, 4
    %s25 = sphi 0, %s27
    %s28 = sphi 0, %s25
    %s29 = sphi 0, %s28
    %s45 = sphi 0, %s29
    %s49 = sphi 0, %s49
    %s51 = sphi 0, %s49
    %s52 = sphi 0, %s51
    %s66 = sphi 0, %s52
    %s70 = sphi 0, %s70
    %s72 = sphi 0, %s70
    %s73 = sphi 0, %s72
    %s87 = sphi 0, %s73
    %s91 = sphi 0, %s91
    %s93 = sphi 0, %s91
    %s94 = sphi 0, %s93
    %s108 = sphi 0, %s94
    %s112 = sphi 0, %s112
    %s114 = sphi 0, %s112
    %s115 = sphi 0, %s114
    %s129 = sphi 0, %s115
    %s133 = sphi 0, %s133
    %s135 = sphi 0, %s133
    %s136 = sphi 0, %s135
    %s150 = sphi 0, %s136
    %s154 = sphi 0, %s154
    %s156 = sphi 0, %s154
    %s157 = sphi 0, %s156
    %s171 = sphi 0, %s157
    %s177 = sphi 0, %s179
    %s180 = sphi 0, %s177
    %s181 = sphi 0, %s180
    %s197 = sphi 0, %s181
  $region4: #{mlp_forward.1} parent=0 // loop_header_branch
    %18 = sbr.rel (%p16) target = $region8
  $region5: #{mlp_forward.1} parent=0 // loop_body
    %s20 = ssub.s32 %s15, 1
    %s21 = ssub.s32 %s15, 2
    %s22 = sadd.s32 %s15, 1
    %s23 = ssub.s32 %s15, %s22
    %p24 = scmp.eq.s32.totalorder %s23, 0
    %s26 = sadd.s32 %s25, 1
    %s27 = scalar_select %p24, %s25, %s26
    %p30 = pneg %p24
    %p31 = scmp.eq.s32.totalorder %s15, 1
    %p32 = por %p30, %p31
    %p33 = scmp.ne.s32.totalorder %s25, %s28
    %p34 = scmp.eq.s32.totalorder %s15, 0
    %p35 = por %p33, %p34
    %p36 = scmp.ne.s32.totalorder %s25, %s28
    %p37 = scmp.eq.s32.totalorder %s20, 1
    %p38 = por %p36, %p37
    %p39 = scmp.ne.s32.totalorder %s28, %s29
    %p40 = scmp.eq.s32.totalorder %s20, 0
    %p41 = por %p39, %p40
    %p42 = scmp.ne.s32.totalorder %s28, %s29
    %p43 = scmp.eq.s32.totalorder %s21, 1
    %p44 = por %p42, %p43
    %p46 = scmp.ne.s32.totalorder %s29, %s45
    %p47 = scmp.eq.s32.totalorder %s21, 0
    %p48 = por %p46, %p47
    %s50 = sadd.s32 %s49, 1
    %p53 = scmp.eq.s32.totalorder %s15, 1
    %p54 = scmp.ne.s32.totalorder %s49, %s51
    %p55 = scmp.eq.s32.totalorder %s15, 0
    %p56 = por %p54, %p55
    %p57 = scmp.ne.s32.totalorder %s49, %s51
    %p58 = scmp.eq.s32.totalorder %s20, 1
    %p59 = por %p57, %p58
    %p60 = scmp.ne.s32.totalorder %s51, %s52
    %p61 = scmp.eq.s32.totalorder %s20, 0
    %p62 = por %p60, %p61
    %p63 = scmp.ne.s32.totalorder %s51, %s52
    %p64 = scmp.eq.s32.totalorder %s21, 1
    %p65 = por %p63, %p64
    %p67 = scmp.ne.s32.totalorder %s52, %s66
    %p68 = scmp.eq.s32.totalorder %s21, 0
    %p69 = por %p67, %p68
    %s71 = sadd.s32 %s70, 1
    %p74 = scmp.eq.s32.totalorder %s15, 1
    %p75 = scmp.ne.s32.totalorder %s70, %s72
    %p76 = scmp.eq.s32.totalorder %s15, 0
    %p77 = por %p75, %p76
    %p78 = scmp.ne.s32.totalorder %s70, %s72
    %p79 = scmp.eq.s32.totalorder %s20, 1
    %p80 = por %p78, %p79
    %p81 = scmp.ne.s32.totalorder %s72, %s73
    %p82 = scmp.eq.s32.totalorder %s20, 0
    %p83 = por %p81, %p82
    %p84 = scmp.ne.s32.totalorder %s72, %s73
    %p85 = scmp.eq.s32.totalorder %s21, 1
    %p86 = por %p84, %p85
    %p88 = scmp.ne.s32.totalorder %s73, %s87
    %p89 = scmp.eq.s32.totalorder %s21, 0
    %p90 = por %p88, %p89
    %s92 = sadd.s32 %s91, 1
    %p95 = scmp.eq.s32.totalorder %s15, 1
    %p96 = scmp.ne.s32.totalorder %s91, %s93
    %p97 = scmp.eq.s32.totalorder %s15, 0
    %p98 = por %p96, %p97
    %p99 = scmp.ne.s32.totalorder %s91, %s93
    %p100 = scmp.eq.s32.totalorder %s20, 1
    %p101 = por %p99, %p100
    %p102 = scmp.ne.s32.totalorder %s93, %s94
    %p103 = scmp.eq.s32.totalorder %s20, 0
    %p104 = por %p102, %p103
    %p105 = scmp.ne.s32.totalorder %s93, %s94
    %p106 = scmp.eq.s32.totalorder %s21, 1
    %p107 = por %p105, %p106
    %p109 = scmp.ne.s32.totalorder %s94, %s108
    %p110 = scmp.eq.s32.totalorder %s21, 0
    %p111 = por %p109, %p110
    %s113 = sadd.s32 %s112, 1
    %p116 = scmp.eq.s32.totalorder %s15, 1
    %p117 = scmp.ne.s32.totalorder %s112, %s114
    %p118 = scmp.eq.s32.totalorder %s15, 0
    %p119 = por %p117, %p118
    %p120 = scmp.ne.s32.totalorder %s112, %s114
    %p121 = scmp.eq.s32.totalorder %s20, 1
    %p122 = por %p120, %p121
    %p123 = scmp.ne.s32.totalorder %s114, %s115
    %p124 = scmp.eq.s32.totalorder %s20, 0
    %p125 = por %p123, %p124
    %p126 = scmp.ne.s32.totalorder %s114, %s115
    %p127 = scmp.eq.s32.totalorder %s21, 1
    %p128 = por %p126, %p127
    %p130 = scmp.ne.s32.totalorder %s115, %s129
    %p131 = scmp.eq.s32.totalorder %s21, 0
    %p132 = por %p130, %p131
    %s134 = sadd.s32 %s133, 1
    %p137 = scmp.eq.s32.totalorder %s15, 1
    %p138 = scmp.ne.s32.totalorder %s133, %s135
    %p139 = scmp.eq.s32.totalorder %s15, 0
    %p140 = por %p138, %p139
    %p141 = scmp.ne.s32.totalorder %s133, %s135
    %p142 = scmp.eq.s32.totalorder %s20, 1
    %p143 = por %p141, %p142
    %p144 = scmp.ne.s32.totalorder %s135, %s136
    %p145 = scmp.eq.s32.totalorder %s20, 0
    %p146 = por %p144, %p145
    %p147 = scmp.ne.s32.totalorder %s135, %s136
    %p148 = scmp.eq.s32.totalorder %s21, 1
    %p149 = por %p147, %p148
    %p151 = scmp.ne.s32.totalorder %s136, %s150
    %p152 = scmp.eq.s32.totalorder %s21, 0
    %p153 = por %p151, %p152
    %s155 = sadd.s32 %s154, 1
    %p158 = scmp.eq.s32.totalorder %s15, 1
    %p159 = scmp.ne.s32.totalorder %s154, %s156
    %p160 = scmp.eq.s32.totalorder %s15, 0
    %p161 = por %p159, %p160
    %p162 = scmp.ne.s32.totalorder %s154, %s156
    %p163 = scmp.eq.s32.totalorder %s20, 1
    %p164 = por %p162, %p163
    %p165 = scmp.ne.s32.totalorder %s156, %s157
    %p166 = scmp.eq.s32.totalorder %s20, 0
    %p167 = por %p165, %p166
    %p168 = scmp.ne.s32.totalorder %s156, %s157
    %p169 = scmp.eq.s32.totalorder %s21, 1
    %p170 = por %p168, %p169
    %p172 = scmp.ne.s32.totalorder %s157, %s171
    %p173 = scmp.eq.s32.totalorder %s21, 0
    %p174 = por %p172, %p173
    %s175 = ssub.s32 %s15, %s22
    %p176 = scmp.eq.s32.totalorder %s175, 0
    %s178 = sadd.s32 %s177, 1
    %s179 = scalar_select %p176, %s177, %s178
    %p182 = pneg %p176
    %p183 = scmp.eq.s32.totalorder %s15, 1
    %p184 = por %p182, %p183
    %p185 = scmp.ne.s32.totalorder %s177, %s180
    %p186 = scmp.eq.s32.totalorder %s15, 0
    %p187 = por %p185, %p186
    %p188 = scmp.ne.s32.totalorder %s177, %s180
    %p189 = scmp.eq.s32.totalorder %s20, 1
    %p190 = por %p188, %p189
    %p191 = scmp.ne.s32.totalorder %s180, %s181
    %p192 = scmp.eq.s32.totalorder %s20, 0
    %p193 = por %p191, %p192
    %p194 = scmp.ne.s32.totalorder %s180, %s181
    %p195 = scmp.eq.s32.totalorder %s21, 1
    %p196 = por %p194, %p195
    %p198 = scmp.ne.s32.totalorder %s181, %s197
    %p199 = scmp.eq.s32.totalorder %s21, 0
    %p200 = por %p198, %p199
    %p201 = scmp.le.s32.totalorder 1, %s15
    %p202 = scmp.lt.s32.totalorder %s15, 3
    %p203 = pnand %p201, %p202
    %p204 = pneg %p203
    // Predicated region
    $region9: #{mlp_forward.1} parent=5 // pred_check
      _
    $region10: #{mlp_forward.1} parent=5 // pred_check_branch
      %206 = sbr.rel (%p203) target = $region12
    $region11: #{mlp_forward.1} parent=5 // pred_region
      %s207 = ssub.s32 %s15, 1
      // Predicated region
      $region13: #{mlp_forward.1} parent=11 // pred_check
        %p208 = pneg %p62
      $region14: #{mlp_forward.1} parent=11 // pred_check_branch
        %210 = sbr.rel (%p208) target = $region16
      $region15: #{mlp_forward.1} parent=11 // pred_region
        _
      $region16: #{mlp_forward.1} parent=11 // pred_fallthru
        _
      // Predicated region
      $region17: #{mlp_forward.1} parent=11 // pred_check
        %p211 = pneg %p83
      $region18: #{mlp_forward.1} parent=11 // pred_check_branch
        %213 = sbr.rel (%p211) target = $region20
      $region19: #{mlp_forward.1} parent=11 // pred_region
        _
      $region20: #{mlp_forward.1} parent=11 // pred_fallthru
        _
      // Predicated region
      $region21: #{mlp_forward.1} parent=11 // pred_check
        %p214 = pneg %p104
      $region22: #{mlp_forward.1} parent=11 // pred_check_branch
        %216 = sbr.rel (%p214) target = $region24
      $region23: #{mlp_forward.1} parent=11 // pred_region
        _
      $region24: #{mlp_forward.1} parent=11 // pred_fallthru
        _
      // Predicated region
      $region25: #{mlp_forward.1} parent=11 // pred_check
        %p217 = pneg %p125
      $region26: #{mlp_forward.1} parent=11 // pred_check_branch
        %219 = sbr.rel (%p217) target = $region28
      $region27: #{mlp_forward.1} parent=11 // pred_region
        _
      $region28: #{mlp_forward.1} parent=11 // pred_fallthru
        _
      // Predicated region
      $region29: #{mlp_forward.1} parent=11 // pred_check
        %p220 = pneg %p146
      $region30: #{mlp_forward.1} parent=11 // pred_check_branch
        %222 = sbr.rel (%p220) target = $region32
      $region31: #{mlp_forward.1} parent=11 // pred_region
        _
      $region32: #{mlp_forward.1} parent=11 // pred_fallthru
        _
      // Predicated region
      $region33: #{mlp_forward.1} parent=11 // pred_check
        %p223 = pneg %p167
      $region34: #{mlp_forward.1} parent=11 // pred_check_branch
        %225 = sbr.rel (%p223) target = $region36
      $region35: #{mlp_forward.1} parent=11 // pred_region
        _
      $region36: #{mlp_forward.1} parent=11 // pred_fallthru
        _
    $region12: #{mlp_forward.1} parent=5 // pred_fallthru
      _
    %p226 = scmp.lt.s32.totalorder %s15, 2
    // Predicated region
    $region37: #{mlp_forward.1} parent=5 // pred_check
      %p227 = pneg %p226
    $region38: #{mlp_forward.1} parent=5 // pred_check_branch
      %229 = sbr.rel (%p227) target = $region40
    $region39: #{mlp_forward.1} parent=5 // pred_region
      // Predicated region
      $region41: #{mlp_forward.1} parent=39 // pred_check
        %p230 = pneg %p35
      $region42: #{mlp_forward.1} parent=39 // pred_check_branch
        %232 = sbr.rel (%p230) target = $region44
      $region43: #{mlp_forward.1} parent=39 // pred_region
        %s233 = smul.u32 4, %s15
        %p234 = scmp.lt.s32.totalorder %s233, 7
        %s235 = scalar_select %p234, %s233, 7
        %s236 = smul.addr %s235, 2
        %s237 = scalar_lea.vmem %s0, %s236
        %s238 = smul.u32 4, %s15
      $region44: #{mlp_forward.1} parent=39 // pred_fallthru
        _
    $region40: #{mlp_forward.1} parent=5 // pred_fallthru
      _
    %p239 = scmp.le.s32.totalorder 1, %s15
    %p240 = scmp.lt.s32.totalorder %s15, 3
    %p241 = pnand %p239, %p240
    %p242 = pneg %p241
    // Predicated region
    $region45: #{mlp_forward.1} parent=5 // pred_check
      _
    $region46: #{mlp_forward.1} parent=5 // pred_check_branch
      %244 = sbr.rel (%p241) target = $region48
    $region47: #{mlp_forward.1} parent=5 // pred_region
      %s245 = ssub.s32 %s15, 1
      %s246 = smul.u32 4, %s20
      %p247 = scmp.lt.s32.totalorder %s246, 7
      %s248 = scalar_select %p247, %s246, 7
      %s249 = smul.addr %s248, 2
      %s250 = scalar_lea.vmem %s0, %s249
      %p251 = pneg %p41
      %p252 = pneg %p38
      %p253 = pneg %p62
      %p254 = pneg %p59
      %p255 = pneg %p83
      %p256 = pneg %p80
      %p257 = pneg %p104
      %p258 = pneg %p101
      %p259 = pneg %p125
      %p260 = pneg %p122
      %p261 = pneg %p146
      %p262 = pneg %p143
      %p263 = pneg %p167
      %p264 = pneg %p164
      %p265 = pneg %p193
      %p266 = pneg %p190
      %s267 = smul.u32 4, %s20
      %p268 = scmp.lt.s32.totalorder %s267, 7
      %s269 = scalar_select %p268, %s267, 7
      %s270 = scalar_lea.vmem %s7, %s269
      %s271 = smul.u32 4, %s20
      %p272 = scmp.lt.s32.totalorder %s271, 7
      %s273 = scalar_select %p272, %s271, 7
      %s274 = smul.addr %s273, 2
      %s275 = scalar_lea.vmem %s0, %s274
      %s276 = smul.u32 4, %s20
      %s277 = smul.u32 4, %s20
      %p278 = scmp.lt.s32.totalorder %s277, 7
      %s279 = scalar_select %p278, %s277, 7
      %s280 = scalar_lea.vmem %s7, %s279
      %s281 = smul.u32 4, %s20
      %v283 = vld [vmem:[%s275] sm:$0xff]
      %v284 = vld [vmem:[%s1] sm:$0xf]
      %v285 = vld [vmem:[%s1 + $0x4] sm:$0xf]
      %v286 = vld [vmem:[%s1 + $0x8] sm:$0xf]
      %v287 = vld [vmem:[%s1 + $0xc] sm:$0xf]
      %v288 = vld [vmem:[%s2] sm:$0xff]
      %v289 = vld [vmem:[%s2 + $0x8] sm:$0xff]
      %v290 = vld [vmem:[%s2 + $0x10] sm:$0xff]
      %v291 = vld [vmem:[%s2 + $0x18] sm:$0xff]
      %293 = vset.pattern.permute.xlu0 0
      %294 = vperm.xlu0 %293, %v288
      %v295 = vpop.permute.xlu0 %294
      %298 = vset.pattern.permute.xlu0 0
      %299 = vperm.xlu0 %298, %v289
      %v300 = vpop.permute.xlu0 %299
      %303 = vset.pattern.permute.xlu0 0
      %304 = vperm.xlu0 %303, %v290
      %v305 = vpop.permute.xlu0 %304
      %308 = vset.pattern.permute.xlu0 0
      %309 = vperm.xlu0 %308, %v291
      %v310 = vpop.permute.xlu0 %309
      %v316 = vunpack.c.l.b16 %v284
      %v317 = vunpack.c.l.b16 %v285
      %v318 = vunpack.c.l.b16 %v286
      %v319 = vunpack.c.l.b16 %v287
      %v320 = vpack.c.b16 %v317, %v316
      %v321 = vpack.c.b16 %v319, %v318
      %323 = vst [vmem:[#allocation1] ss:$4 sm:$0xff] %v283
      %v324 = vld.sshfl [vmem:[#allocation1] sm:$0xff pattern:$0x73625140]
      %v325 = vld.sshfl [vmem:[#allocation1 + $0x8] sm:$0xff pattern:$0x73625140]
      %v326 = vld.sshfl [vmem:[#allocation1 + $0x10] sm:$0xff pattern:$0x73625140]
      %v327 = vld.sshfl [vmem:[#allocation1 + $0x18] sm:$0xff pattern:$0x73625140]
      %vm328 = vcmask 23552
      %v330 = vsel %vm328, %v320, 0
      %v333 = vsel %vm328, %v321, 0
      %vm335 = vcmask 1040384
      %vm336 = vcmask 1041408
      %v337 = vsel %vm335, 4294967295, 65535
      %v338 = vsel %vm336, %v337, 0
      %v339 = vand.u32 %v324, %v338
      %v341 = vand.u32 %v325, %v338
      %v343 = vand.u32 %v326, %v338
      %v345 = vand.u32 %v327, %v338
      %347 = vmatpush.bf16.msra.mxu0 0
      %348 = vmatpush.bf16.msra.mxu0 0
      %349 = vmatpush.bf16.msra.mxu0 0
      %350 = vmatpush.bf16.msra.mxu0 0
      %351 = vmatpush.bf16.msra.mxu0 0
      %352 = vmatpush.bf16.msra.mxu0 0
      %353 = vmatpush.bf16.msra.mxu0 0
      %354 = vmatpush.bf16.msra.mxu0 %v339
      %355 = vmatmul.bf16.gmra.mxu0 %v330
      %v356 = vpop.f32.mrf.mxu0
      %v357 = vadd.f32 %v295, %v356
      %v358 = vpop.f32.mrf.mxu0
      %v359 = vadd.f32 %v300, %v358
      %360 = vmatmul.bf16.gmra.mxu0 %v333
      %v361 = vpop.f32.mrf.mxu0
      %v362 = vadd.f32 %v305, %v361
      %v363 = vpop.f32.mrf.mxu0
      %v364 = vadd.f32 %v310, %v363
      %365 = vdwg.mxu0
      %366 = vmatpush.bf16.msra.mxu0 0
      %367 = vmatpush.bf16.msra.mxu0 0
      %368 = vmatpush.bf16.msra.mxu0 0
      %369 = vmatpush.bf16.msra.mxu0 0
      %370 = vmatpush.bf16.msra.mxu0 0
      %371 = vmatpush.bf16.msra.mxu0 0
      %372 = vmatpush.bf16.msra.mxu0 0
      %373 = vmatpush.bf16.msra.mxu0 %v341
      %374 = vmatmul.bf16.gmra.mxu0 %v330
      %v375 = vpop.f32.mrf.mxu0
      %v376 = vadd.f32 %v295, %v375
      %v377 = vpop.f32.mrf.mxu0
      %v378 = vadd.f32 %v300, %v377
      %379 = vmatmul.bf16.gmra.mxu0 %v333
      %v380 = vpop.f32.mrf.mxu0
      %v381 = vadd.f32 %v305, %v380
      %v382 = vpop.f32.mrf.mxu0
      %v383 = vadd.f32 %v310, %v382
      %384 = vdwg.mxu0
      %385 = vmatpush.bf16.msra.mxu0 0
      %386 = vmatpush.bf16.msra.mxu0 0
      %387 = vmatpush.bf16.msra.mxu0 0
      %388 = vmatpush.bf16.msra.mxu0 0
      %389 = vmatpush.bf16.msra.mxu0 0
      %390 = vmatpush.bf16.msra.mxu0 0
      %391 = vmatpush.bf16.msra.mxu0 0
      %392 = vmatpush.bf16.msra.mxu0 %v343
      %393 = vmatmul.bf16.gmra.mxu0 %v330
      %v394 = vpop.f32.mrf.mxu0
      %v395 = vadd.f32 %v295, %v394
      %v396 = vpop.f32.mrf.mxu0
      %v397 = vadd.f32 %v300, %v396
      %398 = vmatmul.bf16.gmra.mxu0 %v333
      %v399 = vpop.f32.mrf.mxu0
      %v400 = vadd.f32 %v305, %v399
      %v401 = vpop.f32.mrf.mxu0
      %v402 = vadd.f32 %v310, %v401
      %403 = vdwg.mxu0
      %404 = vmatpush.bf16.msra.mxu0 0
      %405 = vmatpush.bf16.msra.mxu0 0
      %406 = vmatpush.bf16.msra.mxu0 0
      %407 = vmatpush.bf16.msra.mxu0 0
      %408 = vmatpush.bf16.msra.mxu0 0
      %409 = vmatpush.bf16.msra.mxu0 0
      %410 = vmatpush.bf16.msra.mxu0 0
      %411 = vmatpush.bf16.msra.mxu0 %v345
      %412 = vmatmul.bf16.gmra.mxu0 %v330
      %v413 = vpop.f32.mrf.mxu0
      %v414 = vadd.f32 %v295, %v413
      %v415 = vpop.f32.mrf.mxu0
      %v416 = vadd.f32 %v300, %v415
      %417 = vmatmul.bf16.gmra.mxu0 %v333
      %v418 = vpop.f32.mrf.mxu0
      %v419 = vadd.f32 %v305, %v418
      %v420 = vpop.f32.mrf.mxu0
      %v421 = vadd.f32 %v310, %v420
      %422 = vdwg.mxu0
      %v423 = vmax.f32 %v357, 0.0
      %v424 = vmax.f32 %v376, 0.0
      %v425 = vmax.f32 %v395, 0.0
      %v426 = vmax.f32 %v414, 0.0
      %v427 = vmax.f32 %v359, 0.0
      %v428 = vmax.f32 %v378, 0.0
      %v429 = vmax.f32 %v397, 0.0
      %v430 = vmax.f32 %v416, 0.0
      %v431 = vmax.f32 %v362, 0.0
      %v432 = vmax.f32 %v381, 0.0
      %v433 = vmax.f32 %v400, 0.0
      %v434 = vmax.f32 %v419, 0.0
      %v435 = vmax.f32 %v364, 0.0
      %v436 = vmax.f32 %v383, 0.0
      %v437 = vmax.f32 %v402, 0.0
      %v438 = vmax.f32 %v421, 0.0
      %v439 = vpack.c.bf16 %v427, %v423
      %v440 = vpack.c.bf16 %v428, %v424
      %v441 = vpack.c.bf16 %v429, %v425
      %v442 = vpack.c.bf16 %v430, %v426
      %v443 = vpack.c.bf16 %v435, %v431
      %v444 = vpack.c.bf16 %v436, %v432
      %v445 = vpack.c.bf16 %v437, %v433
      %v446 = vpack.c.bf16 %v438, %v434
      %v447 = vld [vmem:[%s3] sm:$0xf]
      %v448 = vld [vmem:[%s3 + $0x4] sm:$0xf]
      %v449 = vld [vmem:[%s3 + $0x8] sm:$0xf]
      %v450 = vld [vmem:[%s3 + $0xc] sm:$0xf]
      %v451 = vld [vmem:[%s4] sm:$0xff]
      %v452 = vld [vmem:[%s4 + $0x8] sm:$0xff]
      %v453 = vld [vmem:[%s4 + $0x10] sm:$0xff]
      %v454 = vld [vmem:[%s4 + $0x18] sm:$0xff]
      %456 = vset.pattern.permute.xlu0 0
      %457 = vperm.xlu0 %456, %v451
      %v458 = vpop.permute.xlu0 %457
      %461 = vset.pattern.permute.xlu0 0
      %462 = vperm.xlu0 %461, %v452
      %v463 = vpop.permute.xlu0 %462
      %466 = vset.pattern.permute.xlu0 0
      %467 = vperm.xlu0 %466, %v453
      %v468 = vpop.permute.xlu0 %467
      %471 = vset.pattern.permute.xlu0 0
      %472 = vperm.xlu0 %471, %v454
      %v473 = vpop.permute.xlu0 %472
      %v479 = vunpack.c.l.b16 %v447
      %v480 = vunpack.c.l.b16 %v448
      %v481 = vunpack.c.l.b16 %v449
      %v482 = vunpack.c.l.b16 %v450
      %v483 = vpack.c.b16 %v480, %v479
      %v484 = vpack.c.b16 %v482, %v481
      %vm485 = vcmask 261120
      %v487 = vsel %vm485, %v483, 0
      %v490 = vsel %vm485, %v484, 0
      %492 = vmatpush.bf16.msra.mxu0 0
      %493 = vmatpush.bf16.msra.mxu0 0
      %494 = vmatpush.bf16.msra.mxu0 0
      %495 = vmatpush.bf16.msra.mxu0 0
      %496 = vmatpush.bf16.msra.mxu0 0
      %497 = vmatpush.bf16.msra.mxu0 0
      %498 = vmatpush.bf16.msra.mxu0 %v443
      %499 = vmatpush.bf16.msra.mxu0 %v439
      %500 = vmatmul.bf16.gmra.mxu0 %v487
      %v501 = vpop.f32.mrf.mxu0
      %v502 = vadd.f32 %v458, %v501
      %v503 = vpop.f32.mrf.mxu0
      %v504 = vadd.f32 %v463, %v503
      %505 = vmatmul.bf16.gmra.mxu0 %v490
      %v506 = vpop.f32.mrf.mxu0
      %v507 = vadd.f32 %v468, %v506
      %v508 = vpop.f32.mrf.mxu0
      %v509 = vadd.f32 %v473, %v508
      %510 = vdwg.mxu0
      %511 = vmatpush.bf16.msra.mxu0 0
      %512 = vmatpush.bf16.msra.mxu0 0
      %513 = vmatpush.bf16.msra.mxu0 0
      %514 = vmatpush.bf16.msra.mxu0 0
      %515 = vmatpush.bf16.msra.mxu0 0
      %516 = vmatpush.bf16.msra.mxu0 0
      %517 = vmatpush.bf16.msra.mxu0 %v444
      %518 = vmatpush.bf16.msra.mxu0 %v440
      %519 = vmatmul.bf16.gmra.mxu0 %v487
      %v520 = vpop.f32.mrf.mxu0
      %v521 = vadd.f32 %v458, %v520
      %v522 = vpop.f32.mrf.mxu0
      %v523 = vadd.f32 %v463, %v522
      %524 = vmatmul.bf16.gmra.mxu0 %v490
      %v525 = vpop.f32.mrf.mxu0
      %v526 = vadd.f32 %v468, %v525
      %v527 = vpop.f32.mrf.mxu0
      %v528 = vadd.f32 %v473, %v527
      %529 = vdwg.mxu0
      %530 = vmatpush.bf16.msra.mxu0 0
      %531 = vmatpush.bf16.msra.mxu0 0
      %532 = vmatpush.bf16.msra.mxu0 0
      %533 = vmatpush.bf16.msra.mxu0 0
      %534 = vmatpush.bf16.msra.mxu0 0
      %535 = vmatpush.bf16.msra.mxu0 0
      %536 = vmatpush.bf16.msra.mxu0 %v445
      %537 = vmatpush.bf16.msra.mxu0 %v441
      %538 = vmatmul.bf16.gmra.mxu0 %v487
      %v539 = vpop.f32.mrf.mxu0
      %v540 = vadd.f32 %v458, %v539
      %v541 = vpop.f32.mrf.mxu0
      %v542 = vadd.f32 %v463, %v541
      %543 = vmatmul.bf16.gmra.mxu0 %v490
      %v544 = vpop.f32.mrf.mxu0
      %v545 = vadd.f32 %v468, %v544
      %v546 = vpop.f32.mrf.mxu0
      %v547 = vadd.f32 %v473, %v546
      %548 = vdwg.mxu0
      %549 = vmatpush.bf16.msra.mxu0 0
      %550 = vmatpush.bf16.msra.mxu0 0
      %551 = vmatpush.bf16.msra.mxu0 0
      %552 = vmatpush.bf16.msra.mxu0 0
      %553 = vmatpush.bf16.msra.mxu0 0
      %554 = vmatpush.bf16.msra.mxu0 0
      %555 = vmatpush.bf16.msra.mxu0 %v446
      %556 = vmatpush.bf16.msra.mxu0 %v442
      %557 = vmatmul.bf16.gmra.mxu0 %v487
      %v558 = vpop.f32.mrf.mxu0
      %v559 = vadd.f32 %v458, %v558
      %v560 = vpop.f32.mrf.mxu0
      %v561 = vadd.f32 %v463, %v560
      %562 = vmatmul.bf16.gmra.mxu0 %v490
      %v563 = vpop.f32.mrf.mxu0
      %v564 = vadd.f32 %v468, %v563
      %v565 = vpop.f32.mrf.mxu0
      %v566 = vadd.f32 %v473, %v565
      %567 = vdwg.mxu0
      %v568 = vmax.f32 %v502, 0.0
      %v569 = vmax.f32 %v521, 0.0
      %v570 = vmax.f32 %v540, 0.0
      %v571 = vmax.f32 %v559, 0.0
      %v572 = vmax.f32 %v504, 0.0
      %v573 = vmax.f32 %v523, 0.0
      %v574 = vmax.f32 %v542, 0.0
      %v575 = vmax.f32 %v561, 0.0
      %v576 = vmax.f32 %v507, 0.0
      %v577 = vmax.f32 %v526, 0.0
      %v578 = vmax.f32 %v545, 0.0
      %v579 = vmax.f32 %v564, 0.0
      %v580 = vmax.f32 %v509, 0.0
      %v581 = vmax.f32 %v528, 0.0
      %v582 = vmax.f32 %v547, 0.0
      %v583 = vmax.f32 %v566, 0.0
      %v584 = vpack.c.bf16 %v572, %v568
      %v585 = vpack.c.bf16 %v573, %v569
      %v586 = vpack.c.bf16 %v574, %v570
      %v587 = vpack.c.bf16 %v575, %v571
      %v588 = vpack.c.bf16 %v580, %v576
      %v589 = vpack.c.bf16 %v581, %v577
      %v590 = vpack.c.bf16 %v582, %v578
      %v591 = vpack.c.bf16 %v583, %v579
      %v592 = vld [vmem:[%s5] sm:$0x1]
      %v593 = vld [vmem:[#allocation2] sm:$0x1]
      %595 = vset.pattern.permute.xlu0 0
      %596 = vperm.xlu0 %595, %v593
      %v597 = vpop.permute.xlu0 %596
      %v599 = vperm.slane %v597, 0
      %v601 = vsel %vm485, %v592, 0
      %603 = vmatpush.bf16.msra.mxu0 0
      %604 = vmatpush.bf16.msra.mxu0 0
      %605 = vmatpush.bf16.msra.mxu0 0
      %606 = vmatpush.bf16.msra.mxu0 0
      %607 = vmatpush.bf16.msra.mxu0 0
      %608 = vmatpush.bf16.msra.mxu0 0
      %609 = vmatpush.bf16.msra.mxu0 %v588
      %610 = vmatpush.bf16.msra.mxu0 %v584
      %611 = vmatmul.bf16.gmra.mxu0 %v601
      %v612 = vpop.f32.mrf.mxu0
      %v613 = vadd.f32 %v599, %v612
      %v614 = vpop.f32.mrf.mxu0
      %615 = vdwg.mxu0
      %616 = vmatpush.bf16.msra.mxu0 0
      %617 = vmatpush.bf16.msra.mxu0 0
      %618 = vmatpush.bf16.msra.mxu0 0
      %619 = vmatpush.bf16.msra.mxu0 0
      %620 = vmatpush.bf16.msra.mxu0 0
      %621 = vmatpush.bf16.msra.mxu0 0
      %622 = vmatpush.bf16.msra.mxu0 %v589
      %623 = vmatpush.bf16.msra.mxu0 %v585
      %624 = vmatmul.bf16.gmra.mxu0 %v601
      %v625 = vpop.f32.mrf.mxu0
      %v626 = vadd.f32 %v599, %v625
      %v627 = vpop.f32.mrf.mxu0
      %628 = vdwg.mxu0
      %629 = vmatpush.bf16.msra.mxu0 0
      %630 = vmatpush.bf16.msra.mxu0 0
      %631 = vmatpush.bf16.msra.mxu0 0
      %632 = vmatpush.bf16.msra.mxu0 0
      %633 = vmatpush.bf16.msra.mxu0 0
      %634 = vmatpush.bf16.msra.mxu0 0
      %635 = vmatpush.bf16.msra.mxu0 %v590
      %636 = vmatpush.bf16.msra.mxu0 %v586
      %637 = vmatmul.bf16.gmra.mxu0 %v601
      %v638 = vpop.f32.mrf.mxu0
      %v639 = vadd.f32 %v599, %v638
      %v640 = vpop.f32.mrf.mxu0
      %641 = vdwg.mxu0
      %642 = vmatpush.bf16.msra.mxu0 0
      %643 = vmatpush.bf16.msra.mxu0 0
      %644 = vmatpush.bf16.msra.mxu0 0
      %645 = vmatpush.bf16.msra.mxu0 0
      %646 = vmatpush.bf16.msra.mxu0 0
      %647 = vmatpush.bf16.msra.mxu0 0
      %648 = vmatpush.bf16.msra.mxu0 %v591
      %649 = vmatpush.bf16.msra.mxu0 %v587
      %650 = vmatmul.bf16.gmra.mxu0 %v601
      %v651 = vpop.f32.mrf.mxu0
      %v652 = vadd.f32 %v599, %v651
      %v653 = vpop.f32.mrf.mxu0
      %654 = vdwg.mxu0
      %v659 = vrot.slane %v626, 7
      %v660 = vrot.slane %v639, 6
      %v661 = vrot.slane %v652, 5
      %v662 = vsel %vm335, %v613, %v659
      %vm663 = vcmask 1042434
      %v664 = vsel %vm663, %v660, %v661
      %v665 = vsel %vm336, %v662, %v664
      %v667 = vlaneseq
      %vm668 = vcmp.ge.s32.totalorder %v667, 0
      %vm669 = vcmp.lt.s32.totalorder %v667, 512
      %vm670 = vmand %vm668, %vm669
      %671 = vst.msk [vmem:[%s280] sm:$0xf] %vm670, %v665
      %s672 = smul.u32 4, %s20
      %p673 = scmp.lt.s32.totalorder %s672, 7
      %s674 = scalar_select %p673, %s672, 7
      %s675 = scalar_lea.vmem %s7, %s674
      // Predicated region
      $region49: #{mlp_forward.1} parent=47 // pred_check
        %p676 = pneg %p190
      $region50: #{mlp_forward.1} parent=47 // pred_check_branch
        %678 = sbr.rel (%p676) target = $region52
      $region51: #{mlp_forward.1} parent=47 // pred_region
        %s679 = smul.u32 4, %s20
      $region52: #{mlp_forward.1} parent=47 // pred_fallthru
        _
    $region48: #{mlp_forward.1} parent=5 // pred_fallthru
      _
    %p680 = scmp.le.s32.totalorder 2, %s15
    // Predicated region
    $region53: #{mlp_forward.1} parent=5 // pred_check
      %p681 = pneg %p680
    $region54: #{mlp_forward.1} parent=5 // pred_check_branch
      %683 = sbr.rel (%p681) target = $region56
    $region55: #{mlp_forward.1} parent=5 // pred_region
      %s684 = ssub.s32 %s15, 2
      // Predicated region
      $region57: #{mlp_forward.1} parent=55 // pred_check
        %p685 = pneg %p196
      $region58: #{mlp_forward.1} parent=55 // pred_check_branch
        %687 = sbr.rel (%p685) target = $region60
      $region59: #{mlp_forward.1} parent=55 // pred_region
        %s688 = smul.u32 4, %s21
        %p689 = scmp.lt.s32.totalorder %s688, 7
        %s690 = scalar_select %p689, %s688, 7
        %s691 = scalar_lea.vmem %s7, %s690
      $region60: #{mlp_forward.1} parent=55 // pred_fallthru
        _
    $region56: #{mlp_forward.1} parent=5 // pred_fallthru
      _
  $region6: #{mlp_forward.1} parent=0 // loop_footer
    %s19 = sadd.s32 1, %s15
  $region7: #{mlp_forward.1} parent=0 // loop_footer_branch
    %14 = sbr.rel target = $region3
  $region8: #{mlp_forward.1} parent=0 // loop_exit
    _

// kernel: mlp_forward.1
$region0: #{mlp_forward.1}
  #allocation0 [shape = 'u32[]', space=smem, size = 0x4, offset = 0x4, fixed_abs, tag = 'smem constant byte address 0x4 - core index']
  #allocation1 [shape = 'u32[72,128]{1,0:T(1,128)}', space=vmem, size = 0x9000, scoped, tag = 'internal scratch']
  #allocation2 [shape = 'f32[1,1]{1,0:T(1,128)S(1)}', space=vmem, size = 0x200, scoped, tag = 'scoped memory for mlp_forward.1']
  %s0 = inlined_call_operand.vmem [shape: bf16[3,1024], index: 0, kind: input, shape index: {}]
  %s1 = inlined_call_operand.vmem [shape: bf16[32,3], index: 1, kind: input, shape index: {}]
  %s2 = inlined_call_operand.vmem [shape: f32[32,1], index: 2, kind: input, shape index: {}]
  %s3 = inlined_call_operand.vmem [shape: bf16[32,32], index: 3, kind: input, shape index: {}]
  %s4 = inlined_call_operand.vmem [shape: f32[32,1], index: 4, kind: input, shape index: {}]
  %s5 = inlined_call_operand.vmem [shape: bf16[1,32], index: 5, kind: input, shape index: {}]
  %s6 = inlined_call_operand.<no memory space> [shape: f32[1,1], index: 6, kind: input, shape index: {}]
  %s7 = inlined_call_operand.vmem [shape: f32[1,1024], index: 7, kind: output, shape index: {}]
  %s8 = sld [smem:[#allocation0]]
  $region61: #{mlp_forward.1} parent=0
    _
  %s10 = ssub.s32 1, %s8
  %s11 = scalar_select 0, %s10, %s8
  %v12 = vstv %s6
  %13 = vst [vmem:[#allocation2] sm:$0x1] %v12
  loop: start=0, step=1, limit=4
  $region2: #{mlp_forward.1} parent=0 // loop_pre_header
    _
  $region3: #{mlp_forward.1} parent=0 // loop_header
    %s15 = sphi 0, %s19
    %p16 = scmp.ge.s32.totalorder %s15, 4
    %s25 = sphi 0, %s27
    %s28 = sphi 0, %s25
    %s29 = sphi 0, %s28
    %s45 = sphi 0, %s29
    %s49 = sphi 0, %s49
    %s51 = sphi 0, %s49
    %s52 = sphi 0, %s51
    %s66 = sphi 0, %s52
    %s70 = sphi 0, %s70
    %s72 = sphi 0, %s70
    %s73 = sphi 0, %s72
    %s87 = sphi 0, %s73
    %s91 = sphi 0, %s91
    %s93 = sphi 0, %s91
    %s94 = sphi 0, %s93
    %s108 = sphi 0, %s94
    %s112 = sphi 0, %s112
    %s114 = sphi 0, %s112
    %s115 = sphi 0, %s114
    %s129 = sphi 0, %s115
    %s133 = sphi 0, %s133
    %s135 = sphi 0, %s133
    %s136 = sphi 0, %s135
    %s150 = sphi 0, %s136
    %s154 = sphi 0, %s154
    %s156 = sphi 0, %s154
    %s157 = sphi 0, %s156
    %s171 = sphi 0, %s157
    %s177 = sphi 0, %s179
    %s180 = sphi 0, %s177
    %s181 = sphi 0, %s180
    %s197 = sphi 0, %s181
  $region4: #{mlp_forward.1} parent=0 // loop_header_branch
    %18 = sbr.rel (%p16) target = $region8
  $region5: #{mlp_forward.1} parent=0 // loop_body
    %s20 = ssub.s32 %s15, 1
    %s21 = ssub.s32 %s15, 2
    %s22 = sadd.s32 %s15, 1
    %s23 = ssub.s32 %s15, %s22
    %p24 = scmp.eq.s32.totalorder %s23, 0
    %s26 = sadd.s32 %s25, 1
    %s27 = scalar_select %p24, %s25, %s26
    %p30 = pneg %p24
    %p31 = scmp.eq.s32.totalorder %s15, 1
    %p32 = por %p30, %p31
    %p33 = scmp.ne.s32.totalorder %s25, %s28
    %p34 = scmp.eq.s32.totalorder %s15, 0
    %p35 = por %p33, %p34
    %p36 = scmp.ne.s32.totalorder %s25, %s28
    %p37 = scmp.eq.s32.totalorder %s20, 1
    %p38 = por %p36, %p37
    %p39 = scmp.ne.s32.totalorder %s28, %s29
    %p40 = scmp.eq.s32.totalorder %s20, 0
    %p41 = por %p39, %p40
    %p42 = scmp.ne.s32.totalorder %s28, %s29
    %p43 = scmp.eq.s32.totalorder %s21, 1
    %p44 = por %p42, %p43
    %p46 = scmp.ne.s32.totalorder %s29, %s45
    %p47 = scmp.eq.s32.totalorder %s21, 0
    %p48 = por %p46, %p47
    %s50 = sadd.s32 %s49, 1
    %p53 = scmp.eq.s32.totalorder %s15, 1
    %p54 = scmp.ne.s32.totalorder %s49, %s51
    %p55 = scmp.eq.s32.totalorder %s15, 0
    %p56 = por %p54, %p55
    %p57 = scmp.ne.s32.totalorder %s49, %s51
    %p58 = scmp.eq.s32.totalorder %s20, 1
    %p59 = por %p57, %p58
    %p60 = scmp.ne.s32.totalorder %s51, %s52
    %p61 = scmp.eq.s32.totalorder %s20, 0
    %p62 = por %p60, %p61
    %p63 = scmp.ne.s32.totalorder %s51, %s52
    %p64 = scmp.eq.s32.totalorder %s21, 1
    %p65 = por %p63, %p64
    %p67 = scmp.ne.s32.totalorder %s52, %s66
    %p68 = scmp.eq.s32.totalorder %s21, 0
    %p69 = por %p67, %p68
    %s71 = sadd.s32 %s70, 1
    %p74 = scmp.eq.s32.totalorder %s15, 1
    %p75 = scmp.ne.s32.totalorder %s70, %s72
    %p76 = scmp.eq.s32.totalorder %s15, 0
    %p77 = por %p75, %p76
    %p78 = scmp.ne.s32.totalorder %s70, %s72
    %p79 = scmp.eq.s32.totalorder %s20, 1
    %p80 = por %p78, %p79
    %p81 = scmp.ne.s32.totalorder %s72, %s73
    %p82 = scmp.eq.s32.totalorder %s20, 0
    %p83 = por %p81, %p82
    %p84 = scmp.ne.s32.totalorder %s72, %s73
    %p85 = scmp.eq.s32.totalorder %s21, 1
    %p86 = por %p84, %p85
    %p88 = scmp.ne.s32.totalorder %s73, %s87
    %p89 = scmp.eq.s32.totalorder %s21, 0
    %p90 = por %p88, %p89
    %s92 = sadd.s32 %s91, 1
    %p95 = scmp.eq.s32.totalorder %s15, 1
    %p96 = scmp.ne.s32.totalorder %s91, %s93
    %p97 = scmp.eq.s32.totalorder %s15, 0
    %p98 = por %p96, %p97
    %p99 = scmp.ne.s32.totalorder %s91, %s93
    %p100 = scmp.eq.s32.totalorder %s20, 1
    %p101 = por %p99, %p100
    %p102 = scmp.ne.s32.totalorder %s93, %s94
    %p103 = scmp.eq.s32.totalorder %s20, 0
    %p104 = por %p102, %p103
    %p105 = scmp.ne.s32.totalorder %s93, %s94
    %p106 = scmp.eq.s32.totalorder %s21, 1
    %p107 = por %p105, %p106
    %p109 = scmp.ne.s32.totalorder %s94, %s108
    %p110 = scmp.eq.s32.totalorder %s21, 0
    %p111 = por %p109, %p110
    %s113 = sadd.s32 %s112, 1
    %p116 = scmp.eq.s32.totalorder %s15, 1
    %p117 = scmp.ne.s32.totalorder %s112, %s114
    %p118 = scmp.eq.s32.totalorder %s15, 0
    %p119 = por %p117, %p118
    %p120 = scmp.ne.s32.totalorder %s112, %s114
    %p121 = scmp.eq.s32.totalorder %s20, 1
    %p122 = por %p120, %p121
    %p123 = scmp.ne.s32.totalorder %s114, %s115
    %p124 = scmp.eq.s32.totalorder %s20, 0
    %p125 = por %p123, %p124
    %p126 = scmp.ne.s32.totalorder %s114, %s115
    %p127 = scmp.eq.s32.totalorder %s21, 1
    %p128 = por %p126, %p127
    %p130 = scmp.ne.s32.totalorder %s115, %s129
    %p131 = scmp.eq.s32.totalorder %s21, 0
    %p132 = por %p130, %p131
    %s134 = sadd.s32 %s133, 1
    %p137 = scmp.eq.s32.totalorder %s15, 1
    %p138 = scmp.ne.s32.totalorder %s133, %s135
    %p139 = scmp.eq.s32.totalorder %s15, 0
    %p140 = por %p138, %p139
    %p141 = scmp.ne.s32.totalorder %s133, %s135
    %p142 = scmp.eq.s32.totalorder %s20, 1
    %p143 = por %p141, %p142
    %p144 = scmp.ne.s32.totalorder %s135, %s136
    %p145 = scmp.eq.s32.totalorder %s20, 0
    %p146 = por %p144, %p145
    %p147 = scmp.ne.s32.totalorder %s135, %s136
    %p148 = scmp.eq.s32.totalorder %s21, 1
    %p149 = por %p147, %p148
    %p151 = scmp.ne.s32.totalorder %s136, %s150
    %p152 = scmp.eq.s32.totalorder %s21, 0
    %p153 = por %p151, %p152
    %s155 = sadd.s32 %s154, 1
    %p158 = scmp.eq.s32.totalorder %s15, 1
    %p159 = scmp.ne.s32.totalorder %s154, %s156
    %p160 = scmp.eq.s32.totalorder %s15, 0
    %p161 = por %p159, %p160
    %p162 = scmp.ne.s32.totalorder %s154, %s156
    %p163 = scmp.eq.s32.totalorder %s20, 1
    %p164 = por %p162, %p163
    %p165 = scmp.ne.s32.totalorder %s156, %s157
    %p166 = scmp.eq.s32.totalorder %s20, 0
    %p167 = por %p165, %p166
    %p168 = scmp.ne.s32.totalorder %s156, %s157
    %p169 = scmp.eq.s32.totalorder %s21, 1
    %p170 = por %p168, %p169
    %p172 = scmp.ne.s32.totalorder %s157, %s171
    %p173 = scmp.eq.s32.totalorder %s21, 0
    %p174 = por %p172, %p173
    %s175 = ssub.s32 %s15, %s22
    %p176 = scmp.eq.s32.totalorder %s175, 0
    %s178 = sadd.s32 %s177, 1
    %s179 = scalar_select %p176, %s177, %s178
    %p182 = pneg %p176
    %p183 = scmp.eq.s32.totalorder %s15, 1
    %p184 = por %p182, %p183
    %p185 = scmp.ne.s32.totalorder %s177, %s180
    %p186 = scmp.eq.s32.totalorder %s15, 0
    %p187 = por %p185, %p186
    %p188 = scmp.ne.s32.totalorder %s177, %s180
    %p189 = scmp.eq.s32.totalorder %s20, 1
    %p190 = por %p188, %p189
    %p191 = scmp.ne.s32.totalorder %s180, %s181
    %p192 = scmp.eq.s32.totalorder %s20, 0
    %p193 = por %p191, %p192
    %p194 = scmp.ne.s32.totalorder %s180, %s181
    %p195 = scmp.eq.s32.totalorder %s21, 1
    %p196 = por %p194, %p195
    %p198 = scmp.ne.s32.totalorder %s181, %s197
    %p199 = scmp.eq.s32.totalorder %s21, 0
    %p200 = por %p198, %p199
    %p201 = scmp.le.s32.totalorder 1, %s15
    %p202 = scmp.lt.s32.totalorder %s15, 3
    %p203 = pnand %p201, %p202
    %p204 = pneg %p203
    // Predicated region
    $region9: #{mlp_forward.1} parent=5 // pred_check
      _
    $region10: #{mlp_forward.1} parent=5 // pred_check_branch
      %206 = sbr.rel (%p203) target = $region12
    $region11: #{mlp_forward.1} parent=5 // pred_region
      %s207 = ssub.s32 %s15, 1
      // Predicated region
      $region13: #{mlp_forward.1} parent=11 // pred_check
        %p208 = pneg %p62
      $region14: #{mlp_forward.1} parent=11 // pred_check_branch
        %210 = sbr.rel (%p208) target = $region16
      $region15: #{mlp_forward.1} parent=11 // pred_region
        _
      $region16: #{mlp_forward.1} parent=11 // pred_fallthru
        _
      // Predicated region
      $region17: #{mlp_forward.1} parent=11 // pred_check
        %p211 = pneg %p83
      $region18: #{mlp_forward.1} parent=11 // pred_check_branch
        %213 = sbr.rel (%p211) target = $region20
      $region19: #{mlp_forward.1} parent=11 // pred_region
        _
      $region20: #{mlp_forward.1} parent=11 // pred_fallthru
        _
      // Predicated region
      $region21: #{mlp_forward.1} parent=11 // pred_check
        %p214 = pneg %p104
      $region22: #{mlp_forward.1} parent=11 // pred_check_branch
        %216 = sbr.rel (%p214) target = $region24
      $region23: #{mlp_forward.1} parent=11 // pred_region
        _
      $region24: #{mlp_forward.1} parent=11 // pred_fallthru
        _
      // Predicated region
      $region25: #{mlp_forward.1} parent=11 // pred_check
        %p217 = pneg %p125
      $region26: #{mlp_forward.1} parent=11 // pred_check_branch
        %219 = sbr.rel (%p217) target = $region28
      $region27: #{mlp_forward.1} parent=11 // pred_region
        _
      $region28: #{mlp_forward.1} parent=11 // pred_fallthru
        _
      // Predicated region
      $region29: #{mlp_forward.1} parent=11 // pred_check
        %p220 = pneg %p146
      $region30: #{mlp_forward.1} parent=11 // pred_check_branch
        %222 = sbr.rel (%p220) target = $region32
      $region31: #{mlp_forward.1} parent=11 // pred_region
        _
      $region32: #{mlp_forward.1} parent=11 // pred_fallthru
        _
      // Predicated region
      $region33: #{mlp_forward.1} parent=11 // pred_check
        %p223 = pneg %p167
      $region34: #{mlp_forward.1} parent=11 // pred_check_branch
        %225 = sbr.rel (%p223) target = $region36
      $region35: #{mlp_forward.1} parent=11 // pred_region
        _
      $region36: #{mlp_forward.1} parent=11 // pred_fallthru
        _
    $region12: #{mlp_forward.1} parent=5 // pred_fallthru
      _
    %p226 = scmp.lt.s32.totalorder %s15, 2
    // Predicated region
    $region37: #{mlp_forward.1} parent=5 // pred_check
      %p227 = pneg %p226
    $region38: #{mlp_forward.1} parent=5 // pred_check_branch
      %229 = sbr.rel (%p227) target = $region40
    $region39: #{mlp_forward.1} parent=5 // pred_region
      // Predicated region
      $region41: #{mlp_forward.1} parent=39 // pred_check
        %p230 = pneg %p35
      $region42: #{mlp_forward.1} parent=39 // pred_check_branch
        %232 = sbr.rel (%p230) target = $region44
      $region43: #{mlp_forward.1} parent=39 // pred_region
        %s233 = smul.u32 4, %s15
        %p234 = scmp.lt.s32.totalorder %s233, 7
        %s235 = scalar_select %p234, %s233, 7
        %s236 = smul.addr %s235, 2
        %s237 = scalar_lea.vmem %s0, %s236
        %s238 = smul.u32 4, %s15
      $region44: #{mlp_forward.1} parent=39 // pred_fallthru
        _
    $region40: #{mlp_forward.1} parent=5 // pred_fallthru
      _
    %p239 = scmp.le.s32.totalorder 1, %s15
    %p240 = scmp.lt.s32.totalorder %s15, 3
    %p241 = pnand %p239, %p240
    %p242 = pneg %p241
    // Predicated region
    $region45: #{mlp_forward.1} parent=5 // pred_check
      _
    $region46: #{mlp_forward.1} parent=5 // pred_check_branch
      %244 = sbr.rel (%p241) target = $region48
    $region47: #{mlp_forward.1} parent=5 // pred_region
      %s245 = ssub.s32 %s15, 1
      %s246 = smul.u32 4, %s20
      %p247 = scmp.lt.s32.totalorder %s246, 7
      %s248 = scalar_select %p247, %s246, 7
      %s249 = smul.addr %s248, 2
      %s250 = scalar_lea.vmem %s0, %s249
      %p251 = pneg %p41
      %p252 = pneg %p38
      %p253 = pneg %p62
      %p254 = pneg %p59
      %p255 = pneg %p83
      %p256 = pneg %p80
      %p257 = pneg %p104
      %p258 = pneg %p101
      %p259 = pneg %p125
      %p260 = pneg %p122
      %p261 = pneg %p146
      %p262 = pneg %p143
      %p263 = pneg %p167
      %p264 = pneg %p164
      %p265 = pneg %p193
      %p266 = pneg %p190
      %s267 = smul.u32 4, %s20
      %p268 = scmp.lt.s32.totalorder %s267, 7
      %s269 = scalar_select %p268, %s267, 7
      %s270 = scalar_lea.vmem %s7, %s269
      %s271 = smul.u32 4, %s20
      %p272 = scmp.lt.s32.totalorder %s271, 7
      %s273 = scalar_select %p272, %s271, 7
      %s274 = smul.addr %s273, 2
      %s275 = scalar_lea.vmem %s0, %s274
      %s276 = smul.u32 4, %s20
      %s277 = smul.u32 4, %s20
      %p278 = scmp.lt.s32.totalorder %s277, 7
      %s279 = scalar_select %p278, %s277, 7
      %s280 = scalar_lea.vmem %s7, %s279
      %s281 = smul.u32 4, %s20
      %v283 = vld [vmem:[%s275] sm:$0xff]
      %v284 = vld [vmem:[%s1] sm:$0xf]
      %v285 = vld [vmem:[%s1 + $0x4] sm:$0xf]
      %v286 = vld [vmem:[%s1 + $0x8] sm:$0xf]
      %v287 = vld [vmem:[%s1 + $0xc] sm:$0xf]
      %v288 = vld [vmem:[%s2] sm:$0xff]
      %v289 = vld [vmem:[%s2 + $0x8] sm:$0xff]
      %v290 = vld [vmem:[%s2 + $0x10] sm:$0xff]
      %v291 = vld [vmem:[%s2 + $0x18] sm:$0xff]
      %293 = vset.pattern.permute.xlu0 0
      %294 = vperm.xlu0 %293, %v288
      %v295 = vpop.permute.xlu0 %294
      %298 = vset.pattern.permute.xlu0 0
      %299 = vperm.xlu0 %298, %v289
      %v300 = vpop.permute.xlu0 %299
      %303 = vset.pattern.permute.xlu0 0
      %304 = vperm.xlu0 %303, %v290
      %v305 = vpop.permute.xlu0 %304
      %308 = vset.pattern.permute.xlu0 0
      %309 = vperm.xlu0 %308, %v291
      %v310 = vpop.permute.xlu0 %309
      %v316 = vunpack.c.l.b16 %v284
      %v317 = vunpack.c.l.b16 %v285
      %v318 = vunpack.c.l.b16 %v286
      %v319 = vunpack.c.l.b16 %v287
      %v320 = vpack.c.b16 %v317, %v316
      %v321 = vpack.c.b16 %v319, %v318
      %323 = vst [vmem:[#allocation1] ss:$4 sm:$0xff] %v283
      %v324 = vld.sshfl [vmem:[#allocation1] sm:$0xff pattern:$0x73625140]
      %v325 = vld.sshfl [vmem:[#allocation1 + $0x8] sm:$0xff pattern:$0x73625140]
      %v326 = vld.sshfl [vmem:[#allocation1 + $0x10] sm:$0xff pattern:$0x73625140]
      %v327 = vld.sshfl [vmem:[#allocation1 + $0x18] sm:$0xff pattern:$0x73625140]
      %vm328 = vcmask 23552
      %v330 = vsel %vm328, %v320, 0
      %v333 = vsel %vm328, %v321, 0
      %vm335 = vcmask 1040384
      %vm336 = vcmask 1041408
      %v337 = vsel %vm335, 4294967295, 65535
      %v338 = vsel %vm336, %v337, 0
      %v339 = vand.u32 %v324, %v338
      %v341 = vand.u32 %v325, %v338
      %v343 = vand.u32 %v326, %v338
      %v345 = vand.u32 %v327, %v338
      %347 = vmatpush.bf16.msra.mxu0 0
      %348 = vmatpush.bf16.msra.mxu0 0
      %349 = vmatpush.bf16.msra.mxu0 0
      %350 = vmatpush.bf16.msra.mxu0 0
      %351 = vmatpush.bf16.msra.mxu0 0
      %352 = vmatpush.bf16.msra.mxu0 0
      %353 = vmatpush.bf16.msra.mxu0 0
      %354 = vmatpush.bf16.msra.mxu0 %v339
      %355 = vmatmul.bf16.gmra.mxu0 %v330
      %v356 = vpop.f32.mrf.mxu0
      %v357 = vadd.f32 %v295, %v356
      %v358 = vpop.f32.mrf.mxu0
      %v359 = vadd.f32 %v300, %v358
      %360 = vmatmul.bf16.gmra.mxu0 %v333
      %v361 = vpop.f32.mrf.mxu0
      %v362 = vadd.f32 %v305, %v361
      %v363 = vpop.f32.mrf.mxu0
      %v364 = vadd.f32 %v310, %v363
      %365 = vdwg.mxu0
      %366 = vmatpush.bf16.msra.mxu0 0
      %367 = vmatpush.bf16.msra.mxu0 0
      %368 = vmatpush.bf16.msra.mxu0 0
      %369 = vmatpush.bf16.msra.mxu0 0
      %370 = vmatpush.bf16.msra.mxu0 0
      %371 = vmatpush.bf16.msra.mxu0 0
      %372 = vmatpush.bf16.msra.mxu0 0
      %373 = vmatpush.bf16.msra.mxu0 %v341
      %374 = vmatmul.bf16.gmra.mxu0 %v330
      %v375 = vpop.f32.mrf.mxu0
      %v376 = vadd.f32 %v295, %v375
      %v377 = vpop.f32.mrf.mxu0
      %v378 = vadd.f32 %v300, %v377
      %379 = vmatmul.bf16.gmra.mxu0 %v333
      %v380 = vpop.f32.mrf.mxu0
      %v381 = vadd.f32 %v305, %v380
      %v382 = vpop.f32.mrf.mxu0
      %v383 = vadd.f32 %v310, %v382
      %384 = vdwg.mxu0
      %385 = vmatpush.bf16.msra.mxu0 0
      %386 = vmatpush.bf16.msra.mxu0 0
      %387 = vmatpush.bf16.msra.mxu0 0
      %388 = vmatpush.bf16.msra.mxu0 0
      %389 = vmatpush.bf16.msra.mxu0 0
      %390 = vmatpush.bf16.msra.mxu0 0
      %391 = vmatpush.bf16.msra.mxu0 0
      %392 = vmatpush.bf16.msra.mxu0 %v343
      %393 = vmatmul.bf16.gmra.mxu0 %v330
      %v394 = vpop.f32.mrf.mxu0
      %v395 = vadd.f32 %v295, %v394
      %v396 = vpop.f32.mrf.mxu0
      %v397 = vadd.f32 %v300, %v396
      %398 = vmatmul.bf16.gmra.mxu0 %v333
      %v399 = vpop.f32.mrf.mxu0
      %v400 = vadd.f32 %v305, %v399
      %v401 = vpop.f32.mrf.mxu0
      %v402 = vadd.f32 %v310, %v401
      %403 = vdwg.mxu0
      %404 = vmatpush.bf16.msra.mxu0 0
      %405 = vmatpush.bf16.msra.mxu0 0
      %406 = vmatpush.bf16.msra.mxu0 0
      %407 = vmatpush.bf16.msra.mxu0 0
      %408 = vmatpush.bf16.msra.mxu0 0
      %409 = vmatpush.bf16.msra.mxu0 0
      %410 = vmatpush.bf16.msra.mxu0 0
      %411 = vmatpush.bf16.msra.mxu0 %v345
      %412 = vmatmul.bf16.gmra.mxu0 %v330
      %v413 = vpop.f32.mrf.mxu0
      %v414 = vadd.f32 %v295, %v413
      %v415 = vpop.f32.mrf.mxu0
      %v416 = vadd.f32 %v300, %v415
      %417 = vmatmul.bf16.gmra.mxu0 %v333
      %v418 = vpop.f32.mrf.mxu0
      %v419 = vadd.f32 %v305, %v418
      %v420 = vpop.f32.mrf.mxu0
      %v421 = vadd.f32 %v310, %v420
      %422 = vdwg.mxu0
      %v423 = vmax.f32 %v357, 0.0
      %v424 = vmax.f32 %v376, 0.0
      %v425 = vmax.f32 %v395, 0.0
      %v426 = vmax.f32 %v414, 0.0
      %v427 = vmax.f32 %v359, 0.0
      %v428 = vmax.f32 %v378, 0.0
      %v429 = vmax.f32 %v397, 0.0
      %v430 = vmax.f32 %v416, 0.0
      %v431 = vmax.f32 %v362, 0.0
      %v432 = vmax.f32 %v381, 0.0
      %v433 = vmax.f32 %v400, 0.0
      %v434 = vmax.f32 %v419, 0.0
      %v435 = vmax.f32 %v364, 0.0
      %v436 = vmax.f32 %v383, 0.0
      %v437 = vmax.f32 %v402, 0.0
      %v438 = vmax.f32 %v421, 0.0
      %v439 = vpack.c.bf16 %v427, %v423
      %v440 = vpack.c.bf16 %v428, %v424
      %v441 = vpack.c.bf16 %v429, %v425
      %v442 = vpack.c.bf16 %v430, %v426
      %v443 = vpack.c.bf16 %v435, %v431
      %v444 = vpack.c.bf16 %v436, %v432
      %v445 = vpack.c.bf16 %v437, %v433
      %v446 = vpack.c.bf16 %v438, %v434
      %v447 = vld [vmem:[%s3] sm:$0xf]
      %v448 = vld [vmem:[%s3 + $0x4] sm:$0xf]
      %v449 = vld [vmem:[%s3 + $0x8] sm:$0xf]
      %v450 = vld [vmem:[%s3 + $0xc] sm:$0xf]
      %v451 = vld [vmem:[%s4] sm:$0xff]
      %v452 = vld [vmem:[%s4 + $0x8] sm:$0xff]
      %v453 = vld [vmem:[%s4 + $0x10] sm:$0xff]
      %v454 = vld [vmem:[%s4 + $0x18] sm:$0xff]
      %456 = vset.pattern.permute.xlu0 0
      %457 = vperm.xlu0 %456, %v451
      %v458 = vpop.permute.xlu0 %457
      %461 = vset.pattern.permute.xlu0 0
      %462 = vperm.xlu0 %461, %v452
      %v463 = vpop.permute.xlu0 %462
      %466 = vset.pattern.permute.xlu0 0
      %467 = vperm.xlu0 %466, %v453
      %v468 = vpop.permute.xlu0 %467
      %471 = vset.pattern.permute.xlu0 0
      %472 = vperm.xlu0 %471, %v454
      %v473 = vpop.permute.xlu0 %472
      %v479 = vunpack.c.l.b16 %v447
      %v480 = vunpack.c.l.b16 %v448
      %v481 = vunpack.c.l.b16 %v449
      %v482 = vunpack.c.l.b16 %v450
      %v483 = vpack.c.b16 %v480, %v479
      %v484 = vpack.c.b16 %v482, %v481
      %vm485 = vcmask 261120
      %v487 = vsel %vm485, %v483, 0
      %v490 = vsel %vm485, %v484, 0
      %492 = vmatpush.bf16.msra.mxu0 0
      %493 = vmatpush.bf16.msra.mxu0 0
      %494 = vmatpush.bf16.msra.mxu0 0
      %495 = vmatpush.bf16.msra.mxu0 0
      %496 = vmatpush.bf16.msra.mxu0 0
      %497 = vmatpush.bf16.msra.mxu0 0
      %498 = vmatpush.bf16.msra.mxu0 %v443
      %499 = vmatpush.bf16.msra.mxu0 %v439
      %500 = vmatmul.bf16.gmra.mxu0 %v487
      %v501 = vpop.f32.mrf.mxu0
      %v502 = vadd.f32 %v458, %v501
      %v503 = vpop.f32.mrf.mxu0
      %v504 = vadd.f32 %v463, %v503
      %505 = vmatmul.bf16.gmra.mxu0 %v490
      %v506 = vpop.f32.mrf.mxu0
      %v507 = vadd.f32 %v468, %v506
      %v508 = vpop.f32.mrf.mxu0
      %v509 = vadd.f32 %v473, %v508
      %510 = vdwg.mxu0
      %511 = vmatpush.bf16.msra.mxu0 0
      %512 = vmatpush.bf16.msra.mxu0 0
      %513 = vmatpush.bf16.msra.mxu0 0
      %514 = vmatpush.bf16.msra.mxu0 0
      %515 = vmatpush.bf16.msra.mxu0 0
      %516 = vmatpush.bf16.msra.mxu0 0
      %517 = vmatpush.bf16.msra.mxu0 %v444
      %518 = vmatpush.bf16.msra.mxu0 %v440
      %519 = vmatmul.bf16.gmra.mxu0 %v487
      %v520 = vpop.f32.mrf.mxu0
      %v521 = vadd.f32 %v458, %v520
      %v522 = vpop.f32.mrf.mxu0
      %v523 = vadd.f32 %v463, %v522
      %524 = vmatmul.bf16.gmra.mxu0 %v490
      %v525 = vpop.f32.mrf.mxu0
      %v526 = vadd.f32 %v468, %v525
      %v527 = vpop.f32.mrf.mxu0
      %v528 = vadd.f32 %v473, %v527
      %529 = vdwg.mxu0
      %530 = vmatpush.bf16.msra.mxu0 0
      %531 = vmatpush.bf16.msra.mxu0 0
      %532 = vmatpush.bf16.msra.mxu0 0
      %533 = vmatpush.bf16.msra.mxu0 0
      %534 = vmatpush.bf16.msra.mxu0 0
      %535 = vmatpush.bf16.msra.mxu0 0
      %536 = vmatpush.bf16.msra.mxu0 %v445
      %537 = vmatpush.bf16.msra.mxu0 %v441
      %538 = vmatmul.bf16.gmra.mxu0 %v487
      %v539 = vpop.f32.mrf.mxu0
      %v540 = vadd.f32 %v458, %v539
      %v541 = vpop.f32.mrf.mxu0
      %v542 = vadd.f32 %v463, %v541
      %543 = vmatmul.bf16.gmra.mxu0 %v490
      %v544 = vpop.f32.mrf.mxu0
      %v545 = vadd.f32 %v468, %v544
      %v546 = vpop.f32.mrf.mxu0
      %v547 = vadd.f32 %v473, %v546
      %548 = vdwg.mxu0
      %549 = vmatpush.bf16.msra.mxu0 0
      %550 = vmatpush.bf16.msra.mxu0 0
      %551 = vmatpush.bf16.msra.mxu0 0
      %552 = vmatpush.bf16.msra.mxu0 0
      %553 = vmatpush.bf16.msra.mxu0 0
      %554 = vmatpush.bf16.msra.mxu0 0
      %555 = vmatpush.bf16.msra.mxu0 %v446
      %556 = vmatpush.bf16.msra.mxu0 %v442
      %557 = vmatmul.bf16.gmra.mxu0 %v487
      %v558 = vpop.f32.mrf.mxu0
      %v559 = vadd.f32 %v458, %v558
      %v560 = vpop.f32.mrf.mxu0
      %v561 = vadd.f32 %v463, %v560
      %562 = vmatmul.bf16.gmra.mxu0 %v490
      %v563 = vpop.f32.mrf.mxu0
      %v564 = vadd.f32 %v468, %v563
      %v565 = vpop.f32.mrf.mxu0
      %v566 = vadd.f32 %v473, %v565
      %567 = vdwg.mxu0
      %v568 = vmax.f32 %v502, 0.0
      %v569 = vmax.f32 %v521, 0.0
      %v570 = vmax.f32 %v540, 0.0
      %v571 = vmax.f32 %v559, 0.0
      %v572 = vmax.f32 %v504, 0.0
      %v573 = vmax.f32 %v523, 0.0
      %v574 = vmax.f32 %v542, 0.0
      %v575 = vmax.f32 %v561, 0.0
      %v576 = vmax.f32 %v507, 0.0
      %v577 = vmax.f32 %v526, 0.0
      %v578 = vmax.f32 %v545, 0.0
      %v579 = vmax.f32 %v564, 0.0
      %v580 = vmax.f32 %v509, 0.0
      %v581 = vmax.f32 %v528, 0.0
      %v582 = vmax.f32 %v547, 0.0
      %v583 = vmax.f32 %v566, 0.0
      %v584 = vpack.c.bf16 %v572, %v568
      %v585 = vpack.c.bf16 %v573, %v569
      %v586 = vpack.c.bf16 %v574, %v570
      %v587 = vpack.c.bf16 %v575, %v571
      %v588 = vpack.c.bf16 %v580, %v576
      %v589 = vpack.c.bf16 %v581, %v577
      %v590 = vpack.c.bf16 %v582, %v578
      %v591 = vpack.c.bf16 %v583, %v579
      %v592 = vld [vmem:[%s5] sm:$0x1]
      %v593 = vld [vmem:[#allocation2] sm:$0x1]
      %595 = vset.pattern.permute.xlu0 0
      %596 = vperm.xlu0 %595, %v593
      %v597 = vpop.permute.xlu0 %596
      %v599 = vperm.slane %v597, 0
      %v601 = vsel %vm485, %v592, 0
      %603 = vmatpush.bf16.msra.mxu0 0
      %604 = vmatpush.bf16.msra.mxu0 0
      %605 = vmatpush.bf16.msra.mxu0 0
      %606 = vmatpush.bf16.msra.mxu0 0
      %607 = vmatpush.bf16.msra.mxu0 0
      %608 = vmatpush.bf16.msra.mxu0 0
      %609 = vmatpush.bf16.msra.mxu0 %v588
      %610 = vmatpush.bf16.msra.mxu0 %v584
      %611 = vmatmul.bf16.gmra.mxu0 %v601
      %v612 = vpop.f32.mrf.mxu0
      %v613 = vadd.f32 %v599, %v612
      %v614 = vpop.f32.mrf.mxu0
      %615 = vdwg.mxu0
      %616 = vmatpush.bf16.msra.mxu0 0
      %617 = vmatpush.bf16.msra.mxu0 0
      %618 = vmatpush.bf16.msra.mxu0 0
      %619 = vmatpush.bf16.msra.mxu0 0
      %620 = vmatpush.bf16.msra.mxu0 0
      %621 = vmatpush.bf16.msra.mxu0 0
      %622 = vmatpush.bf16.msra.mxu0 %v589
      %623 = vmatpush.bf16.msra.mxu0 %v585
      %624 = vmatmul.bf16.gmra.mxu0 %v601
      %v625 = vpop.f32.mrf.mxu0
      %v626 = vadd.f32 %v599, %v625
      %v627 = vpop.f32.mrf.mxu0
      %628 = vdwg.mxu0
      %629 = vmatpush.bf16.msra.mxu0 0
      %630 = vmatpush.bf16.msra.mxu0 0
      %631 = vmatpush.bf16.msra.mxu0 0
      %632 = vmatpush.bf16.msra.mxu0 0
      %633 = vmatpush.bf16.msra.mxu0 0
      %634 = vmatpush.bf16.msra.mxu0 0
      %635 = vmatpush.bf16.msra.mxu0 %v590
      %636 = vmatpush.bf16.msra.mxu0 %v586
      %637 = vmatmul.bf16.gmra.mxu0 %v601
      %v638 = vpop.f32.mrf.mxu0
      %v639 = vadd.f32 %v599, %v638
      %v640 = vpop.f32.mrf.mxu0
      %641 = vdwg.mxu0
      %642 = vmatpush.bf16.msra.mxu0 0
      %643 = vmatpush.bf16.msra.mxu0 0
      %644 = vmatpush.bf16.msra.mxu0 0
      %645 = vmatpush.bf16.msra.mxu0 0
      %646 = vmatpush.bf16.msra.mxu0 0
      %647 = vmatpush.bf16.msra.mxu0 0
      %648 = vmatpush.bf16.msra.mxu0 %v591
      %649 = vmatpush.bf16.msra.mxu0 %v587
      %650 = vmatmul.bf16.gmra.mxu0 %v601
      %v651 = vpop.f32.mrf.mxu0
      %v652 = vadd.f32 %v599, %v651
      %v653 = vpop.f32.mrf.mxu0
      %654 = vdwg.mxu0
      %v659 = vrot.slane %v626, 7
      %v660 = vrot.slane %v639, 6
      %v661 = vrot.slane %v652, 5
      %v662 = vsel %vm335, %v613, %v659
      %vm663 = vcmask 1042434
      %v664 = vsel %vm663, %v660, %v661
      %v665 = vsel %vm336, %v662, %v664
      %v667 = vlaneseq
      %vm668 = vcmp.ge.s32.totalorder %v667, 0
      %vm669 = vcmp.lt.s32.totalorder %v667, 512
      %vm670 = vmand %vm668, %vm669
      %671 = vst.msk [vmem:[%s280] sm:$0xf] %vm670, %v665
      %s672 = smul.u32 4, %s20
      %p673 = scmp.lt.s32.totalorder %s672, 7
      %s674 = scalar_select %p673, %s672, 7
      %s675 = scalar_lea.vmem %s7, %s674
      // Predicated region
      $region49: #{mlp_forward.1} parent=47 // pred_check
        %p676 = pneg %p190
      $region50: #{mlp_forward.1} parent=47 // pred_check_branch
        %678 = sbr.rel (%p676) target = $region52
      $region51: #{mlp_forward.1} parent=47 // pred_region
        %s679 = smul.u32 4, %s20
      $region52: #{mlp_forward.1} parent=47 // pred_fallthru
        _
    $region48: #{mlp_forward.1} parent=5 // pred_fallthru
      _
    %p680 = scmp.le.s32.totalorder 2, %s15
    // Predicated region
    $region53: #{mlp_forward.1} parent=5 // pred_check
      %p681 = pneg %p680
    $region54: #{mlp_forward.1} parent=5 // pred_check_branch
      %683 = sbr.rel (%p681) target = $region56
    $region55: #{mlp_forward.1} parent=5 // pred_region
      %s684 = ssub.s32 %s15, 2
      // Predicated region
      $region57: #{mlp_forward.1} parent=55 // pred_check
        %p685 = pneg %p196
      $region58: #{mlp_forward.1} parent=55 // pred_check_branch
        %687 = sbr.rel (%p685) target = $region60
      $region59: #{mlp_forward.1} parent=55 // pred_region
        %s688 = smul.u32 4, %s21
        %p689 = scmp.lt.s32.totalorder %s688, 7
        %s690 = scalar_select %p689, %s688, 7
        %s691 = scalar_lea.vmem %s7, %s690
      $region60: #{mlp_forward.1} parent=55 // pred_fallthru
        _
    $region56: #{mlp_forward.1} parent=5 // pred_fallthru
      _
  $region6: #{mlp_forward.1} parent=0 // loop_footer
    %s19 = sadd.s32 1, %s15
  $region7: #{mlp_forward.1} parent=0 // loop_footer_branch
    %14 = sbr.rel target = $region3
  $region8: #{mlp_forward.1} parent=0 // loop_exit
    _

</llo_original>
